<compile_context>
chip_gen: v7x
topology: tpu7x:2x2x1
jax: 0.10.0
libtpu: 0.0.40
codegen_flags: <defaults>
</compile_context>

<pallas_src>
import functools

import jax
import jax.numpy as jnp
from jax.experimental import pallas as pl
from jax.experimental.pallas import tpu as pltpu


# ----------------------------- in-kernel math ------------------------------

def _gelu_exact(x):
    # torch.nn.GELU() default: 0.5*x*(1+erf(x/sqrt(2))).  erf via the
    # Abramowitz & Stegun 7.1.26 polynomial (|err| < 1.5e-7, far below the
    # bf16-matmul noise floor).  exp and the approximate reciprocal land on
    # the EUP slot, leaving only a handful of FMAs/selects on the VALU.
    a1, a2, a3, a4, a5 = (0.254829592, -0.284496736, 1.421413741,
                          -1.453152027, 1.061405429)
    p = 0.3275911
    z = x * 0.7071067811865476
    sign = jnp.where(z >= 0.0, 1.0, -1.0)
    az = jnp.abs(z)
    t = pl.reciprocal(1.0 + p * az, approx=True)     # EUP vrcp, not a VALU div
    poly = ((((a5 * t + a4) * t + a3) * t + a2) * t + a1) * t
    erf = sign * (1.0 - poly * jnp.exp(-az * az))
    return 0.5 * x * (1.0 + erf)


# --------------------------------- kernel ----------------------------------

def _input_module_kernel(
    x_ref,                       # (tm, D_in)        bf16
    lin_w_ref, lin_b_ref,        # (D_in, Ep) bf16, (1, Ep) f32
    norm_g_ref, norm_b_ref,      # (1, Ep) f32
    n1_g_ref, n1_b_ref,          # (2, 1, Ep) f32
    ff1_w_ref, ff1_b_ref,        # (2, Ep, 2E) bf16, (2, 1, 2E) f32
    ff2_w_ref, ff2_b_ref,        # (2, 2E, Ep) bf16, (2, 1, Ep) f32
    n2_g_ref, n2_b_ref,          # (2, 1, Ep) f32
    gw_ref, gate_b_ref,          # (2, 2*Ep, Ep) bf16 (fused [Wy;Wres]), (2,1,Ep)
    fin_g_ref, fin_b_ref,        # (1, Ep) f32
    out_ref,                     # (tm, Ep) f32
    *, e_true,
):
    ep = out_ref.shape[-1]
    inv_e = 1.0 / float(e_true)
    if e_true == ep:
        fmask = 1.0                                   # no feature padding
    else:
        lane = jax.lax.broadcasted_iota(jnp.int32, (1, ep), 1)
        fmask = (lane < e_true).astype(jnp.float32)   # 1 on real features

    def layer_norm(v, gamma, beta, eps=1e-5):
        # torch.nn.LayerNorm over the *real* E features; pad lanes of v are
        # guaranteed zero, and padded gamma/beta are zero, so pad lanes stay 0.
        mu = jnp.sum(v, axis=-1, keepdims=True) * inv_e
        d = (v - mu) * fmask
        var = jnp.sum(d * d, axis=-1, keepdims=True) * inv_e
        return d * jax.lax.rsqrt(var + eps) * gamma + beta

    # --- linear + leaky_relu(0.01) + norm ---
    h = jnp.dot(x_ref[...], lin_w_ref[...], preferred_element_type=jnp.float32)
    h = h + lin_b_ref[...]
    h = jnp.where(h >= 0.0, h, 0.01 * h)
    h = layer_norm(h, norm_g_ref[...], norm_b_ref[...])

    # --- two GatedResidualBlocks (params stacked along leading axis) ---
    for blk in range(2):                              # static unroll
        residual = h
        y = layer_norm(h, n1_g_ref[blk], n1_b_ref[blk])
        y = jnp.dot(y.astype(jnp.bfloat16), ff1_w_ref[blk],
                    preferred_element_type=jnp.float32) + ff1_b_ref[blk]
        y = _gelu_exact(y)
        # TODO(synk): nn.Dropout(0.1) is identity in eval mode; training-mode
        # stochastic dropout (pltpu.prng_*) is not implemented here.
        y = jnp.dot(y.astype(jnp.bfloat16), ff2_w_ref[blk],
                    preferred_element_type=jnp.float32) + ff2_b_ref[blk]
        y = layer_norm(y, n2_g_ref[blk], n2_b_ref[blk])
        # gate = sigmoid(cat([y, residual]) @ Wg + bg) as ONE K=2*Ep matmul.
        cat = jnp.concatenate([y, residual], axis=-1).astype(jnp.bfloat16)
        gate = jax.nn.sigmoid(
            jnp.dot(cat, gw_ref[blk], preferred_element_type=jnp.float32)
            + gate_b_ref[blk])
        h = residual + gate * (y - residual)          # == g*y + (1-g)*residual

    # --- final norm ---
    h = layer_norm(h, fin_g_ref[...], fin_b_ref[...])
    out_ref[...] = h.astype(out_ref.dtype)


# -------------------------------- wrapper -----------------------------------

_PARAM_ORDER = ("lin_w", "lin_b", "norm_g", "norm_b",
                "n1_g", "n1_b", "ff1_w", "ff1_b", "ff2_w", "ff2_b",
                "n2_g", "n2_b", "gw", "gate_b", "fin_g", "fin_b")


def _round_up(n, m):
    return (n + m - 1) // m * m


@functools.partial(jax.jit, static_argnames=("e", "tm"))
def input_module_forward(x, packed, *, e, tm=256):
    """x: (..., D_in) float32  ->  (..., e) float32."""
    lead = x.shape[:-1]
    d_in = x.shape[-1]
    x2 = x.reshape(-1, d_in).astype(jnp.bfloat16)     # halve streamed-x DMA
    n = x2.shape[0]
    ep = packed["lin_w"].shape[-1]                    # lane-padded feature dim

    # Row tile: large enough to fill MXU sublanes / amortize per-step grid
    # overhead, clamped so tiny inputs run as a single grid step.  At real
    # sizes tm=256 keeps >=2 "parallel" steps so both v7x TensorCores work.
    tm_eff = min(tm, _round_up(n, 16))
    n_pad = _round_up(n, tm_eff)
    if n_pad != n:
        x2 = jnp.pad(x2, ((0, n_pad - n), (0, 0)))

    def full_spec(name):
        nd = packed[name].ndim
        return pl.BlockSpec(packed[name].shape, lambda i, _nd=nd: (0,) * _nd)

    in_specs = [pl.BlockSpec((tm_eff, d_in), lambda i: (i, 0))]
    in_specs += [full_spec(p) for p in _PARAM_ORDER]
    # TODO(synk): if param sizes ever grow, mark these grid-invariant specs
    # pipeline_mode=pl.Buffered(1) (or stage once to VMEM scratch) to halve
    # their resident footprint on v7x's smaller VMEM.

    out = pl.pallas_call(
        functools.partial(_input_module_kernel, e_true=e),
        out_shape=jax.ShapeDtypeStruct((n_pad, ep), jnp.float32),
        grid_spec=pltpu.PrefetchScalarGridSpec(
            num_scalar_prefetch=0,
            grid=(n_pad // tm_eff,),
            in_specs=in_specs,
            out_specs=pl.BlockSpec((tm_eff, ep), lambda i: (i, 0)),
        ),
        compiler_params=pltpu.CompilerParams(
            dimension_semantics=("parallel",)),
    )(x2, *[packed[p] for p in _PARAM_ORDER])

    out = out[:n, :e]
    return out.reshape(*lead, e)


# --------------------------- deterministic params ---------------------------

def init_params(key, d_in, e):
    """Unpadded f32 params mirroring the PyTorch module's initialization."""
    ks = iter(jax.random.split(key, 16))
    f32 = jnp.float32

    def uni(k, shape, bound):
        return jax.random.uniform(k, shape, f32, -bound, bound)

    xb = (6.0 / (d_in + e)) ** 0.5        # xavier_uniform_ for the input linear
    b1 = 1.0 / (e ** 0.5)                 # default Linear init bound, fan_in=e
    b2 = 1.0 / ((2 * e) ** 0.5)           # fan_in = 2e
    return {
        "lin_w": uni(next(ks), (d_in, e), xb),
        "lin_b": jnp.zeros((1, e), f32),
        "norm_g": jnp.ones((1, e), f32), "norm_b": jnp.zeros((1, e), f32),
        "n1_g": jnp.ones((2, 1, e), f32), "n1_b": jnp.zeros((2, 1, e), f32),
        "ff1_w": uni(next(ks), (2, e, 2 * e), b1),
        "ff1_b": uni(next(ks), (2, 1, 2 * e), b1),
        "ff2_w": uni(next(ks), (2, 2 * e, e), b2),
        "ff2_b": uni(next(ks), (2, 1, e), b2),
        "n2_g": jnp.ones((2, 1, e), f32), "n2_b": jnp.zeros((2, 1, e), f32),
        # gate Linear(2e -> e), weight split into the [y | residual] halves
        "gw_y": uni(next(ks), (2, e, e), b2),
        "gw_r": uni(next(ks), (2, e, e), b2),
        "gate_b": uni(next(ks), (2, 1, e), b2),
        "fin_g": jnp.ones((1, e), f32), "fin_b": jnp.zeros((1, e), f32),
    }


def pack_params(p, e):
    """Zero-pad the feature dim to a multiple of 128 lanes, fuse the gate
    weight halves into one (2, 2*Ep, Ep) matrix, and cast matmul weights to
    bf16 (biases / norm affine stay f32).  Padded gamma/beta are ZERO so pad
    lanes stay identically zero through every LayerNorm."""
    ep = _round_up(e, 128)
    pe = ep - e
    bf16, f32 = jnp.bfloat16, jnp.float32

    def pad_axis(a, axis):
        if pe == 0:
            return a
        cfg = [(0, 0)] * a.ndim
        cfg[axis] = (0, pe)
        return jnp.pad(a, cfg)

    def pad_last(a):
        return pad_axis(a, a.ndim - 1)

    gw_y = pad_axis(pad_last(p["gw_y"]), 1)           # (2, Ep, Ep)
    gw_r = pad_axis(pad_last(p["gw_r"]), 1)           # (2, Ep, Ep)
    return {
        "lin_w": pad_last(p["lin_w"]).astype(bf16),
        "lin_b": pad_last(p["lin_b"]).astype(f32),
        "norm_g": pad_last(p["norm_g"]).astype(f32),
        "norm_b": pad_last(p["norm_b"]).astype(f32),
        "n1_g": pad_last(p["n1_g"]).astype(f32),
        "n1_b": pad_last(p["n1_b"]).astype(f32),
        "ff1_w": pad_axis(p["ff1_w"], 1).astype(bf16),   # (2, Ep, 2e)
        "ff1_b": p["ff1_b"].astype(f32),
        "ff2_w": pad_last(p["ff2_w"]).astype(bf16),      # (2, 2e, Ep)
        "ff2_b": pad_last(p["ff2_b"]).astype(f32),
        "n2_g": pad_last(p["n2_g"]).astype(f32),
        "n2_b": pad_last(p["n2_b"]).astype(f32),
        "gw": jnp.concatenate([gw_y, gw_r], axis=1).astype(bf16),  # (2,2Ep,Ep)
        "gate_b": pad_last(p["gate_b"]).astype(f32),
        "fin_g": pad_last(p["fin_g"]).astype(f32),
        "fin_b": pad_last(p["fin_b"]).astype(f32),
    }


# ----------------------------------- main ------------------------------------

if __name__ == "__main__":
    key = jax.random.PRNGKey(0)
    k_x, k_p = jax.random.split(key)

    B, S = 2, 8
    D_IN = 32          # config['embedding_dimensions']
    E = 64             # config['input_embedding_size']

    x = jax.random.normal(k_x, (B, S, D_IN), jnp.float32)
    raw = init_params(k_p, D_IN, E)
    packed = pack_params(raw, E)

    y = input_module_forward(x, packed, e=E)
    jax.block_until_ready(y)
    assert y.shape == (B, S, E) and y.dtype == jnp.float32
    assert bool(jnp.all(jnp.isfinite(y)))
    print("KERNEL_OK")
</pallas_src>

<mosaic_0001>
module attributes {stable_mosaic.version = 11 : i64} {
  func.func @_input_module_kernel(%arg0: i32, %arg1: memref<16x32xbf16, #tpu.memory_space<vmem>>, %arg2: memref<32x128xbf16, #tpu.memory_space<vmem>>, %arg3: memref<1x128xf32, #tpu.memory_space<vmem>>, %arg4: memref<1x128xf32, #tpu.memory_space<vmem>>, %arg5: memref<1x128xf32, #tpu.memory_space<vmem>>, %arg6: memref<2x1x128xf32, #tpu.memory_space<vmem>>, %arg7: memref<2x1x128xf32, #tpu.memory_space<vmem>>, %arg8: memref<2x128x128xbf16, #tpu.memory_space<vmem>>, %arg9: memref<2x1x128xf32, #tpu.memory_space<vmem>>, %arg10: memref<2x128x128xbf16, #tpu.memory_space<vmem>>, %arg11: memref<2x1x128xf32, #tpu.memory_space<vmem>>, %arg12: memref<2x1x128xf32, #tpu.memory_space<vmem>>, %arg13: memref<2x1x128xf32, #tpu.memory_space<vmem>>, %arg14: memref<2x256x128xbf16, #tpu.memory_space<vmem>>, %arg15: memref<2x1x128xf32, #tpu.memory_space<vmem>>, %arg16: memref<1x128xf32, #tpu.memory_space<vmem>>, %arg17: memref<1x128xf32, #tpu.memory_space<vmem>>, %arg18: memref<16x128xf32, #tpu.memory_space<vmem>>) attributes {dimension_semantics = [#tpu.dimension_semantics<parallel>], iteration_bounds = array<i64: 1>, scalar_prefetch = 0 : i64, scratch_operands = 0 : i64, tpu.core_type = #tpu.core_type<tc>, window_params = [{transform_indices = @transform_0, window_bounds = array<i64: 16, 32>}, {pipeline_mode = #tpu.pipeline_mode<synchronous>, transform_indices = @transform_1, window_bounds = array<i64: 32, 128>}, {pipeline_mode = #tpu.pipeline_mode<synchronous>, transform_indices = @transform_2, window_bounds = array<i64: 1, 128>}, {pipeline_mode = #tpu.pipeline_mode<synchronous>, transform_indices = @transform_3, window_bounds = array<i64: 1, 128>}, {pipeline_mode = #tpu.pipeline_mode<synchronous>, transform_indices = @transform_4, window_bounds = array<i64: 1, 128>}, {pipeline_mode = #tpu.pipeline_mode<synchronous>, transform_indices = @transform_5, window_bounds = array<i64: 2, 1, 128>}, {pipeline_mode = #tpu.pipeline_mode<synchronous>, transform_indices = @transform_6, window_bounds = array<i64: 2, 1, 128>}, {pipeline_mode = #tpu.pipeline_mode<synchronous>, transform_indices = @transform_7, window_bounds = array<i64: 2, 128, 128>}, {pipeline_mode = #tpu.pipeline_mode<synchronous>, transform_indices = @transform_8, window_bounds = array<i64: 2, 1, 128>}, {pipeline_mode = #tpu.pipeline_mode<synchronous>, transform_indices = @transform_9, window_bounds = array<i64: 2, 128, 128>}, {pipeline_mode = #tpu.pipeline_mode<synchronous>, transform_indices = @transform_10, window_bounds = array<i64: 2, 1, 128>}, {pipeline_mode = #tpu.pipeline_mode<synchronous>, transform_indices = @transform_11, window_bounds = array<i64: 2, 1, 128>}, {pipeline_mode = #tpu.pipeline_mode<synchronous>, transform_indices = @transform_12, window_bounds = array<i64: 2, 1, 128>}, {pipeline_mode = #tpu.pipeline_mode<synchronous>, transform_indices = @transform_13, window_bounds = array<i64: 2, 256, 128>}, {pipeline_mode = #tpu.pipeline_mode<synchronous>, transform_indices = @transform_14, window_bounds = array<i64: 2, 1, 128>}, {pipeline_mode = #tpu.pipeline_mode<synchronous>, transform_indices = @transform_15, window_bounds = array<i64: 1, 128>}, {pipeline_mode = #tpu.pipeline_mode<synchronous>, transform_indices = @transform_16, window_bounds = array<i64: 1, 128>}, {transform_indices = @transform_17, window_bounds = array<i64: 16, 128>}]} {
    %0 = tpu.iota {dimensions = array<i32: 1>} : vector<1x128xi32>
    %c64_i32 = arith.constant 64 : i32
    %1 = vector.broadcast %c64_i32 : i32 to vector<1x128xi32>
    %2 = arith.cmpi slt, %0, %1 : vector<1x128xi32>
    %3 = arith.extui %2 : vector<1x128xi1> to vector<1x128xi32>
    %4 = arith.sitofp %3 : vector<1x128xi32> to vector<1x128xf32>
    %c0 = arith.constant 0 : index
    %c0_0 = arith.constant 0 : index
    %5 = vector.load %arg1[%c0, %c0_0] : memref<16x32xbf16, #tpu.memory_space<vmem>>, vector<16x32xbf16>
    %c0_1 = arith.constant 0 : index
    %c0_2 = arith.constant 0 : index
    %6 = vector.load %arg2[%c0_1, %c0_2] : memref<32x128xbf16, #tpu.memory_space<vmem>>, vector<32x128xbf16>
    %cst = arith.constant dense<0.000000e+00> : vector<16x128xf32>
    %7 = tpu.matmul %5, %6, %cst {dimension_numbers = #tpu.dot_dimension_numbers<[1], [0], [0], [1], [0, 0, 1, 1], [], []>} : vector<16x32xbf16>, vector<32x128xbf16>, vector<16x128xf32> -> vector<16x128xf32>
    %c0_3 = arith.constant 0 : index
    %c0_4 = arith.constant 0 : index
    %8 = vector.load %arg3[%c0_3, %c0_4] : memref<1x128xf32, #tpu.memory_space<vmem>>, vector<1x128xf32>
    %9 = vector.broadcast %8 : vector<1x128xf32> to vector<16x128xf32>
    %10 = arith.addf %7, %9 : vector<16x128xf32>
    %cst_5 = arith.constant 0.000000e+00 : f32
    %11 = vector.broadcast %cst_5 : f32 to vector<16x128xf32>
    %12 = arith.cmpf oge, %10, %11 : vector<16x128xf32>
    %cst_6 = arith.constant 0.00999999977 : f32
    %13 = vector.broadcast %cst_6 : f32 to vector<16x128xf32>
    %14 = arith.mulf %13, %10 : vector<16x128xf32>
    %15 = arith.select %12, %10, %14 : vector<16x128xi1>, vector<16x128xf32>
    %c0_7 = arith.constant 0 : index
    %c0_8 = arith.constant 0 : index
    %16 = vector.load %arg4[%c0_7, %c0_8] : memref<1x128xf32, #tpu.memory_space<vmem>>, vector<1x128xf32>
    %c0_9 = arith.constant 0 : index
    %c0_10 = arith.constant 0 : index
    %17 = vector.load %arg5[%c0_9, %c0_10] : memref<1x128xf32, #tpu.memory_space<vmem>>, vector<1x128xf32>
    %cst_11 = arith.constant dense<0.000000e+00> : vector<16xf32>
    %18 = vector.multi_reduction <add>, %15, %cst_11 [1] : vector<16x128xf32> to vector<16xf32>
    %19 = vector.shape_cast %18 : vector<16xf32> to vector<16x1xf32>
    %cst_12 = arith.constant 1.562500e-02 : f32
    %20 = vector.broadcast %cst_12 : f32 to vector<16x1xf32>
    %21 = arith.mulf %19, %20 : vector<16x1xf32>
    %22 = vector.broadcast %21 : vector<16x1xf32> to vector<16x128xf32>
    %23 = arith.subf %15, %22 : vector<16x128xf32>
    %24 = vector.broadcast %4 : vector<1x128xf32> to vector<16x128xf32>
    %25 = arith.mulf %23, %24 : vector<16x128xf32>
    %26 = arith.mulf %25, %25 : vector<16x128xf32>
    %cst_13 = arith.constant dense<0.000000e+00> : vector<16xf32>
    %27 = vector.multi_reduction <add>, %26, %cst_13 [1] : vector<16x128xf32> to vector<16xf32>
    %28 = vector.shape_cast %27 : vector<16xf32> to vector<16x1xf32>
    %cst_14 = arith.constant 1.562500e-02 : f32
    %29 = vector.broadcast %cst_14 : f32 to vector<16x1xf32>
    %30 = arith.mulf %28, %29 : vector<16x1xf32>
    %cst_15 = arith.constant 9.99999974E-6 : f32
    %31 = vector.broadcast %cst_15 : f32 to vector<16x1xf32>
    %32 = arith.addf %30, %31 : vector<16x1xf32>
    %33 = math.rsqrt %32 : vector<16x1xf32>
    %34 = vector.broadcast %33 : vector<16x1xf32> to vector<16x128xf32>
    %35 = arith.mulf %25, %34 : vector<16x128xf32>
    %36 = vector.broadcast %16 : vector<1x128xf32> to vector<16x128xf32>
    %37 = arith.mulf %35, %36 : vector<16x128xf32>
    %38 = vector.broadcast %17 : vector<1x128xf32> to vector<16x128xf32>
    %39 = arith.addf %37, %38 : vector<16x128xf32>
    %c0_16 = arith.constant 0 : index
    %c0_17 = arith.constant 0 : index
    %c0_18 = arith.constant 0 : index
    %40 = vector.load %arg6[%c0_16, %c0_17, %c0_18] : memref<2x1x128xf32, #tpu.memory_space<vmem>>, vector<1x1x128xf32>
    %41 = vector.shape_cast %40 : vector<1x1x128xf32> to vector<1x128xf32>
    %c0_19 = arith.constant 0 : index
    %c0_20 = arith.constant 0 : index
    %c0_21 = arith.constant 0 : index
    %42 = vector.load %arg7[%c0_19, %c0_20, %c0_21] : memref<2x1x128xf32, #tpu.memory_space<vmem>>, vector<1x1x128xf32>
    %43 = vector.shape_cast %42 : vector<1x1x128xf32> to vector<1x128xf32>
    %cst_22 = arith.constant dense<0.000000e+00> : vector<16xf32>
    %44 = vector.multi_reduction <add>, %39, %cst_22 [1] : vector<16x128xf32> to vector<16xf32>
    %45 = vector.shape_cast %44 : vector<16xf32> to vector<16x1xf32>
    %cst_23 = arith.constant 1.562500e-02 : f32
    %46 = vector.broadcast %cst_23 : f32 to vector<16x1xf32>
    %47 = arith.mulf %45, %46 : vector<16x1xf32>
    %48 = vector.broadcast %47 : vector<16x1xf32> to vector<16x128xf32>
    %49 = arith.subf %39, %48 : vector<16x128xf32>
    %50 = vector.broadcast %4 : vector<1x128xf32> to vector<16x128xf32>
    %51 = arith.mulf %49, %50 : vector<16x128xf32>
    %52 = arith.mulf %51, %51 : vector<16x128xf32>
    %cst_24 = arith.constant dense<0.000000e+00> : vector<16xf32>
    %53 = vector.multi_reduction <add>, %52, %cst_24 [1] : vector<16x128xf32> to vector<16xf32>
    %54 = vector.shape_cast %53 : vector<16xf32> to vector<16x1xf32>
    %cst_25 = arith.constant 1.562500e-02 : f32
    %55 = vector.broadcast %cst_25 : f32 to vector<16x1xf32>
    %56 = arith.mulf %54, %55 : vector<16x1xf32>
    %cst_26 = arith.constant 9.99999974E-6 : f32
    %57 = vector.broadcast %cst_26 : f32 to vector<16x1xf32>
    %58 = arith.addf %56, %57 : vector<16x1xf32>
    %59 = math.rsqrt %58 : vector<16x1xf32>
    %60 = vector.broadcast %59 : vector<16x1xf32> to vector<16x128xf32>
    %61 = arith.mulf %51, %60 : vector<16x128xf32>
    %62 = vector.broadcast %41 : vector<1x128xf32> to vector<16x128xf32>
    %63 = arith.mulf %61, %62 : vector<16x128xf32>
    %64 = vector.broadcast %43 : vector<1x128xf32> to vector<16x128xf32>
    %65 = arith.addf %63, %64 : vector<16x128xf32>
    %66 = arith.truncf %65 : vector<16x128xf32> to vector<16x128xbf16>
    %c0_27 = arith.constant 0 : index
    %c0_28 = arith.constant 0 : index
    %c0_29 = arith.constant 0 : index
    %67 = vector.load %arg8[%c0_27, %c0_28, %c0_29] : memref<2x128x128xbf16, #tpu.memory_space<vmem>>, vector<1x128x128xbf16>
    %68 = vector.shape_cast %67 : vector<1x128x128xbf16> to vector<128x128xbf16>
    %cst_30 = arith.constant dense<0.000000e+00> : vector<16x128xf32>
    %69 = tpu.matmul %66, %68, %cst_30 {dimension_numbers = #tpu.dot_dimension_numbers<[1], [0], [0], [1], [0, 0, 1, 1], [], []>} : vector<16x128xbf16>, vector<128x128xbf16>, vector<16x128xf32> -> vector<16x128xf32>
    %c0_31 = arith.constant 0 : index
    %c0_32 = arith.constant 0 : index
    %c0_33 = arith.constant 0 : index
    %70 = vector.load %arg9[%c0_31, %c0_32, %c0_33] : memref<2x1x128xf32, #tpu.memory_space<vmem>>, vector<1x1x128xf32>
    %71 = vector.shape_cast %70 : vector<1x1x128xf32> to vector<1x128xf32>
    %72 = vector.broadcast %71 : vector<1x128xf32> to vector<16x128xf32>
    %73 = arith.addf %69, %72 : vector<16x128xf32>
    %cst_34 = arith.constant 0.707106769 : f32
    %74 = vector.broadcast %cst_34 : f32 to vector<16x128xf32>
    %75 = arith.mulf %73, %74 : vector<16x128xf32>
    %cst_35 = arith.constant 0.000000e+00 : f32
    %76 = vector.broadcast %cst_35 : f32 to vector<16x128xf32>
    %77 = arith.cmpf oge, %75, %76 : vector<16x128xf32>
    %cst_36 = arith.constant 1.000000e+00 : f32
    %cst_37 = arith.constant -1.000000e+00 : f32
    %78 = vector.broadcast %cst_36 : f32 to vector<16x128xf32>
    %79 = vector.broadcast %cst_37 : f32 to vector<16x128xf32>
    %80 = arith.select %77, %78, %79 : vector<16x128xi1>, vector<16x128xf32>
    %81 = math.absf %75 : vector<16x128xf32>
    %cst_38 = arith.constant 0.327591091 : f32
    %82 = vector.broadcast %cst_38 : f32 to vector<16x128xf32>
    %83 = arith.mulf %82, %81 : vector<16x128xf32>
    %cst_39 = arith.constant 1.000000e+00 : f32
    %84 = vector.broadcast %cst_39 : f32 to vector<16x128xf32>
    %85 = arith.addf %84, %83 : vector<16x128xf32>
    %86 = tpu.reciprocal %85 {approx = true} : vector<16x128xf32> -> vector<16x128xf32>
    %cst_40 = arith.constant 1.06140542 : f32
    %87 = vector.broadcast %cst_40 : f32 to vector<16x128xf32>
    %88 = arith.mulf %87, %86 : vector<16x128xf32>
    %cst_41 = arith.constant -1.45315206 : f32
    %89 = vector.broadcast %cst_41 : f32 to vector<16x128xf32>
    %90 = arith.addf %88, %89 : vector<16x128xf32>
    %91 = arith.mulf %90, %86 : vector<16x128xf32>
    %cst_42 = arith.constant 1.42141378 : f32
    %92 = vector.broadcast %cst_42 : f32 to vector<16x128xf32>
    %93 = arith.addf %91, %92 : vector<16x128xf32>
    %94 = arith.mulf %93, %86 : vector<16x128xf32>
    %cst_43 = arith.constant -0.284496725 : f32
    %95 = vector.broadcast %cst_43 : f32 to vector<16x128xf32>
    %96 = arith.addf %94, %95 : vector<16x128xf32>
    %97 = arith.mulf %96, %86 : vector<16x128xf32>
    %cst_44 = arith.constant 0.254829586 : f32
    %98 = vector.broadcast %cst_44 : f32 to vector<16x128xf32>
    %99 = arith.addf %97, %98 : vector<16x128xf32>
    %100 = arith.mulf %99, %86 : vector<16x128xf32>
    %cst_45 = arith.constant 0.000000e+00 : f32
    %101 = vector.broadcast %cst_45 : f32 to vector<16x128xf32>
    %102 = arith.subf %101, %81 : vector<16x128xf32>
    %103 = arith.mulf %102, %81 : vector<16x128xf32>
    %104 = math.exp %103 : vector<16x128xf32>
    %105 = arith.mulf %100, %104 : vector<16x128xf32>
    %cst_46 = arith.constant 1.000000e+00 : f32
    %106 = vector.broadcast %cst_46 : f32 to vector<16x128xf32>
    %107 = arith.subf %106, %105 : vector<16x128xf32>
    %108 = arith.mulf %80, %107 : vector<16x128xf32>
    %cst_47 = arith.constant 5.000000e-01 : f32
    %109 = vector.broadcast %cst_47 : f32 to vector<16x128xf32>
    %110 = arith.mulf %109, %73 : vector<16x128xf32>
    %cst_48 = arith.constant 1.000000e+00 : f32
    %111 = vector.broadcast %cst_48 : f32 to vector<16x128xf32>
    %112 = arith.addf %111, %108 : vector<16x128xf32>
    %113 = arith.mulf %110, %112 : vector<16x128xf32>
    %114 = arith.truncf %113 : vector<16x128xf32> to vector<16x128xbf16>
    %c0_49 = arith.constant 0 : index
    %c0_50 = arith.constant 0 : index
    %c0_51 = arith.constant 0 : index
    %115 = vector.load %arg10[%c0_49, %c0_50, %c0_51] : memref<2x128x128xbf16, #tpu.memory_space<vmem>>, vector<1x128x128xbf16>
    %116 = vector.shape_cast %115 : vector<1x128x128xbf16> to vector<128x128xbf16>
    %cst_52 = arith.constant dense<0.000000e+00> : vector<16x128xf32>
    %117 = tpu.matmul %114, %116, %cst_52 {dimension_numbers = #tpu.dot_dimension_numbers<[1], [0], [0], [1], [0, 0, 1, 1], [], []>} : vector<16x128xbf16>, vector<128x128xbf16>, vector<16x128xf32> -> vector<16x128xf32>
    %c0_53 = arith.constant 0 : index
    %c0_54 = arith.constant 0 : index
    %c0_55 = arith.constant 0 : index
    %118 = vector.load %arg11[%c0_53, %c0_54, %c0_55] : memref<2x1x128xf32, #tpu.memory_space<vmem>>, vector<1x1x128xf32>
    %119 = vector.shape_cast %118 : vector<1x1x128xf32> to vector<1x128xf32>
    %120 = vector.broadcast %119 : vector<1x128xf32> to vector<16x128xf32>
    %121 = arith.addf %117, %120 : vector<16x128xf32>
    %c0_56 = arith.constant 0 : index
    %c0_57 = arith.constant 0 : index
    %c0_58 = arith.constant 0 : index
    %122 = vector.load %arg12[%c0_56, %c0_57, %c0_58] : memref<2x1x128xf32, #tpu.memory_space<vmem>>, vector<1x1x128xf32>
    %123 = vector.shape_cast %122 : vector<1x1x128xf32> to vector<1x128xf32>
    %c0_59 = arith.constant 0 : index
    %c0_60 = arith.constant 0 : index
    %c0_61 = arith.constant 0 : index
    %124 = vector.load %arg13[%c0_59, %c0_60, %c0_61] : memref<2x1x128xf32, #tpu.memory_space<vmem>>, vector<1x1x128xf32>
    %125 = vector.shape_cast %124 : vector<1x1x128xf32> to vector<1x128xf32>
    %cst_62 = arith.constant dense<0.000000e+00> : vector<16xf32>
    %126 = vector.multi_reduction <add>, %121, %cst_62 [1] : vector<16x128xf32> to vector<16xf32>
    %127 = vector.shape_cast %126 : vector<16xf32> to vector<16x1xf32>
    %cst_63 = arith.constant 1.562500e-02 : f32
    %128 = vector.broadcast %cst_63 : f32 to vector<16x1xf32>
    %129 = arith.mulf %127, %128 : vector<16x1xf32>
    %130 = vector.broadcast %129 : vector<16x1xf32> to vector<16x128xf32>
    %131 = arith.subf %121, %130 : vector<16x128xf32>
    %132 = vector.broadcast %4 : vector<1x128xf32> to vector<16x128xf32>
    %133 = arith.mulf %131, %132 : vector<16x128xf32>
    %134 = arith.mulf %133, %133 : vector<16x128xf32>
    %cst_64 = arith.constant dense<0.000000e+00> : vector<16xf32>
    %135 = vector.multi_reduction <add>, %134, %cst_64 [1] : vector<16x128xf32> to vector<16xf32>
    %136 = vector.shape_cast %135 : vector<16xf32> to vector<16x1xf32>
    %cst_65 = arith.constant 1.562500e-02 : f32
    %137 = vector.broadcast %cst_65 : f32 to vector<16x1xf32>
    %138 = arith.mulf %136, %137 : vector<16x1xf32>
    %cst_66 = arith.constant 9.99999974E-6 : f32
    %139 = vector.broadcast %cst_66 : f32 to vector<16x1xf32>
    %140 = arith.addf %138, %139 : vector<16x1xf32>
    %141 = math.rsqrt %140 : vector<16x1xf32>
    %142 = vector.broadcast %141 : vector<16x1xf32> to vector<16x128xf32>
    %143 = arith.mulf %133, %142 : vector<16x128xf32>
    %144 = vector.broadcast %123 : vector<1x128xf32> to vector<16x128xf32>
    %145 = arith.mulf %143, %144 : vector<16x128xf32>
    %146 = vector.broadcast %125 : vector<1x128xf32> to vector<16x128xf32>
    %147 = arith.addf %145, %146 : vector<16x128xf32>
    %148 = tpu.concatenate %147, %39 in 1 : vector<16x128xf32>, vector<16x128xf32> -> vector<16x256xf32>
    %149 = arith.truncf %148 : vector<16x256xf32> to vector<16x256xbf16>
    %c0_67 = arith.constant 0 : index
    %c0_68 = arith.constant 0 : index
    %c0_69 = arith.constant 0 : index
    %150 = vector.load %arg14[%c0_67, %c0_68, %c0_69] : memref<2x256x128xbf16, #tpu.memory_space<vmem>>, vector<1x256x128xbf16>
    %151 = vector.shape_cast %150 : vector<1x256x128xbf16> to vector<256x128xbf16>
    %cst_70 = arith.constant dense<0.000000e+00> : vector<16x128xf32>
    %152 = tpu.matmul %149, %151, %cst_70 {dimension_numbers = #tpu.dot_dimension_numbers<[1], [0], [0], [1], [0, 0, 1, 1], [], []>} : vector<16x256xbf16>, vector<256x128xbf16>, vector<16x128xf32> -> vector<16x128xf32>
    %c0_71 = arith.constant 0 : index
    %c0_72 = arith.constant 0 : index
    %c0_73 = arith.constant 0 : index
    %153 = vector.load %arg15[%c0_71, %c0_72, %c0_73] : memref<2x1x128xf32, #tpu.memory_space<vmem>>, vector<1x1x128xf32>
    %154 = vector.shape_cast %153 : vector<1x1x128xf32> to vector<1x128xf32>
    %155 = vector.broadcast %154 : vector<1x128xf32> to vector<16x128xf32>
    %156 = arith.addf %152, %155 : vector<16x128xf32>
    %157 = arith.negf %156 : vector<16x128xf32>
    %158 = math.exp %157 : vector<16x128xf32>
    %cst_74 = arith.constant 1.000000e+00 : f32
    %159 = vector.broadcast %cst_74 : f32 to vector<16x128xf32>
    %160 = arith.addf %159, %158 : vector<16x128xf32>
    %161 = arith.divf %159, %160 : vector<16x128xf32>
    %162 = arith.subf %147, %39 : vector<16x128xf32>
    %163 = arith.mulf %161, %162 : vector<16x128xf32>
    %164 = arith.addf %39, %163 : vector<16x128xf32>
    %c1 = arith.constant 1 : index
    %c0_75 = arith.constant 0 : index
    %c0_76 = arith.constant 0 : index
    %165 = vector.load %arg6[%c1, %c0_75, %c0_76] : memref<2x1x128xf32, #tpu.memory_space<vmem>>, vector<1x1x128xf32>
    %166 = vector.shape_cast %165 : vector<1x1x128xf32> to vector<1x128xf32>
    %c1_77 = arith.constant 1 : index
    %c0_78 = arith.constant 0 : index
    %c0_79 = arith.constant 0 : index
    %167 = vector.load %arg7[%c1_77, %c0_78, %c0_79] : memref<2x1x128xf32, #tpu.memory_space<vmem>>, vector<1x1x128xf32>
    %168 = vector.shape_cast %167 : vector<1x1x128xf32> to vector<1x128xf32>
    %cst_80 = arith.constant dense<0.000000e+00> : vector<16xf32>
    %169 = vector.multi_reduction <add>, %164, %cst_80 [1] : vector<16x128xf32> to vector<16xf32>
    %170 = vector.shape_cast %169 : vector<16xf32> to vector<16x1xf32>
    %cst_81 = arith.constant 1.562500e-02 : f32
    %171 = vector.broadcast %cst_81 : f32 to vector<16x1xf32>
    %172 = arith.mulf %170, %171 : vector<16x1xf32>
    %173 = vector.broadcast %172 : vector<16x1xf32> to vector<16x128xf32>
    %174 = arith.subf %164, %173 : vector<16x128xf32>
    %175 = vector.broadcast %4 : vector<1x128xf32> to vector<16x128xf32>
    %176 = arith.mulf %174, %175 : vector<16x128xf32>
    %177 = arith.mulf %176, %176 : vector<16x128xf32>
    %cst_82 = arith.constant dense<0.000000e+00> : vector<16xf32>
    %178 = vector.multi_reduction <add>, %177, %cst_82 [1] : vector<16x128xf32> to vector<16xf32>
    %179 = vector.shape_cast %178 : vector<16xf32> to vector<16x1xf32>
    %cst_83 = arith.constant 1.562500e-02 : f32
    %180 = vector.broadcast %cst_83 : f32 to vector<16x1xf32>
    %181 = arith.mulf %179, %180 : vector<16x1xf32>
    %cst_84 = arith.constant 9.99999974E-6 : f32
    %182 = vector.broadcast %cst_84 : f32 to vector<16x1xf32>
    %183 = arith.addf %181, %182 : vector<16x1xf32>
    %184 = math.rsqrt %183 : vector<16x1xf32>
    %185 = vector.broadcast %184 : vector<16x1xf32> to vector<16x128xf32>
    %186 = arith.mulf %176, %185 : vector<16x128xf32>
    %187 = vector.broadcast %166 : vector<1x128xf32> to vector<16x128xf32>
    %188 = arith.mulf %186, %187 : vector<16x128xf32>
    %189 = vector.broadcast %168 : vector<1x128xf32> to vector<16x128xf32>
    %190 = arith.addf %188, %189 : vector<16x128xf32>
    %191 = arith.truncf %190 : vector<16x128xf32> to vector<16x128xbf16>
    %c1_85 = arith.constant 1 : index
    %c0_86 = arith.constant 0 : index
    %c0_87 = arith.constant 0 : index
    %192 = vector.load %arg8[%c1_85, %c0_86, %c0_87] : memref<2x128x128xbf16, #tpu.memory_space<vmem>>, vector<1x128x128xbf16>
    %193 = vector.shape_cast %192 : vector<1x128x128xbf16> to vector<128x128xbf16>
    %cst_88 = arith.constant dense<0.000000e+00> : vector<16x128xf32>
    %194 = tpu.matmul %191, %193, %cst_88 {dimension_numbers = #tpu.dot_dimension_numbers<[1], [0], [0], [1], [0, 0, 1, 1], [], []>} : vector<16x128xbf16>, vector<128x128xbf16>, vector<16x128xf32> -> vector<16x128xf32>
    %c1_89 = arith.constant 1 : index
    %c0_90 = arith.constant 0 : index
    %c0_91 = arith.constant 0 : index
    %195 = vector.load %arg9[%c1_89, %c0_90, %c0_91] : memref<2x1x128xf32, #tpu.memory_space<vmem>>, vector<1x1x128xf32>
    %196 = vector.shape_cast %195 : vector<1x1x128xf32> to vector<1x128xf32>
    %197 = vector.broadcast %196 : vector<1x128xf32> to vector<16x128xf32>
    %198 = arith.addf %194, %197 : vector<16x128xf32>
    %cst_92 = arith.constant 0.707106769 : f32
    %199 = vector.broadcast %cst_92 : f32 to vector<16x128xf32>
    %200 = arith.mulf %198, %199 : vector<16x128xf32>
    %cst_93 = arith.constant 0.000000e+00 : f32
    %201 = vector.broadcast %cst_93 : f32 to vector<16x128xf32>
    %202 = arith.cmpf oge, %200, %201 : vector<16x128xf32>
    %cst_94 = arith.constant 1.000000e+00 : f32
    %cst_95 = arith.constant -1.000000e+00 : f32
    %203 = vector.broadcast %cst_94 : f32 to vector<16x128xf32>
    %204 = vector.broadcast %cst_95 : f32 to vector<16x128xf32>
    %205 = arith.select %202, %203, %204 : vector<16x128xi1>, vector<16x128xf32>
    %206 = math.absf %200 : vector<16x128xf32>
    %cst_96 = arith.constant 0.327591091 : f32
    %207 = vector.broadcast %cst_96 : f32 to vector<16x128xf32>
    %208 = arith.mulf %207, %206 : vector<16x128xf32>
    %cst_97 = arith.constant 1.000000e+00 : f32
    %209 = vector.broadcast %cst_97 : f32 to vector<16x128xf32>
    %210 = arith.addf %209, %208 : vector<16x128xf32>
    %211 = tpu.reciprocal %210 {approx = true} : vector<16x128xf32> -> vector<16x128xf32>
    %cst_98 = arith.constant 1.06140542 : f32
    %212 = vector.broadcast %cst_98 : f32 to vector<16x128xf32>
    %213 = arith.mulf %212, %211 : vector<16x128xf32>
    %cst_99 = arith.constant -1.45315206 : f32
    %214 = vector.broadcast %cst_99 : f32 to vector<16x128xf32>
    %215 = arith.addf %213, %214 : vector<16x128xf32>
    %216 = arith.mulf %215, %211 : vector<16x128xf32>
    %cst_100 = arith.constant 1.42141378 : f32
    %217 = vector.broadcast %cst_100 : f32 to vector<16x128xf32>
    %218 = arith.addf %216, %217 : vector<16x128xf32>
    %219 = arith.mulf %218, %211 : vector<16x128xf32>
    %cst_101 = arith.constant -0.284496725 : f32
    %220 = vector.broadcast %cst_101 : f32 to vector<16x128xf32>
    %221 = arith.addf %219, %220 : vector<16x128xf32>
    %222 = arith.mulf %221, %211 : vector<16x128xf32>
    %cst_102 = arith.constant 0.254829586 : f32
    %223 = vector.broadcast %cst_102 : f32 to vector<16x128xf32>
    %224 = arith.addf %222, %223 : vector<16x128xf32>
    %225 = arith.mulf %224, %211 : vector<16x128xf32>
    %cst_103 = arith.constant 0.000000e+00 : f32
    %226 = vector.broadcast %cst_103 : f32 to vector<16x128xf32>
    %227 = arith.subf %226, %206 : vector<16x128xf32>
    %228 = arith.mulf %227, %206 : vector<16x128xf32>
    %229 = math.exp %228 : vector<16x128xf32>
    %230 = arith.mulf %225, %229 : vector<16x128xf32>
    %cst_104 = arith.constant 1.000000e+00 : f32
    %231 = vector.broadcast %cst_104 : f32 to vector<16x128xf32>
    %232 = arith.subf %231, %230 : vector<16x128xf32>
    %233 = arith.mulf %205, %232 : vector<16x128xf32>
    %cst_105 = arith.constant 5.000000e-01 : f32
    %234 = vector.broadcast %cst_105 : f32 to vector<16x128xf32>
    %235 = arith.mulf %234, %198 : vector<16x128xf32>
    %cst_106 = arith.constant 1.000000e+00 : f32
    %236 = vector.broadcast %cst_106 : f32 to vector<16x128xf32>
    %237 = arith.addf %236, %233 : vector<16x128xf32>
    %238 = arith.mulf %235, %237 : vector<16x128xf32>
    %239 = arith.truncf %238 : vector<16x128xf32> to vector<16x128xbf16>
    %c1_107 = arith.constant 1 : index
    %c0_108 = arith.constant 0 : index
    %c0_109 = arith.constant 0 : index
    %240 = vector.load %arg10[%c1_107, %c0_108, %c0_109] : memref<2x128x128xbf16, #tpu.memory_space<vmem>>, vector<1x128x128xbf16>
    %241 = vector.shape_cast %240 : vector<1x128x128xbf16> to vector<128x128xbf16>
    %cst_110 = arith.constant dense<0.000000e+00> : vector<16x128xf32>
    %242 = tpu.matmul %239, %241, %cst_110 {dimension_numbers = #tpu.dot_dimension_numbers<[1], [0], [0], [1], [0, 0, 1, 1], [], []>} : vector<16x128xbf16>, vector<128x128xbf16>, vector<16x128xf32> -> vector<16x128xf32>
    %c1_111 = arith.constant 1 : index
    %c0_112 = arith.constant 0 : index
    %c0_113 = arith.constant 0 : index
    %243 = vector.load %arg11[%c1_111, %c0_112, %c0_113] : memref<2x1x128xf32, #tpu.memory_space<vmem>>, vector<1x1x128xf32>
    %244 = vector.shape_cast %243 : vector<1x1x128xf32> to vector<1x128xf32>
    %245 = vector.broadcast %244 : vector<1x128xf32> to vector<16x128xf32>
    %246 = arith.addf %242, %245 : vector<16x128xf32>
    %c1_114 = arith.constant 1 : index
    %c0_115 = arith.constant 0 : index
    %c0_116 = arith.constant 0 : index
    %247 = vector.load %arg12[%c1_114, %c0_115, %c0_116] : memref<2x1x128xf32, #tpu.memory_space<vmem>>, vector<1x1x128xf32>
    %248 = vector.shape_cast %247 : vector<1x1x128xf32> to vector<1x128xf32>
    %c1_117 = arith.constant 1 : index
    %c0_118 = arith.constant 0 : index
    %c0_119 = arith.constant 0 : index
    %249 = vector.load %arg13[%c1_117, %c0_118, %c0_119] : memref<2x1x128xf32, #tpu.memory_space<vmem>>, vector<1x1x128xf32>
    %250 = vector.shape_cast %249 : vector<1x1x128xf32> to vector<1x128xf32>
    %cst_120 = arith.constant dense<0.000000e+00> : vector<16xf32>
    %251 = vector.multi_reduction <add>, %246, %cst_120 [1] : vector<16x128xf32> to vector<16xf32>
    %252 = vector.shape_cast %251 : vector<16xf32> to vector<16x1xf32>
    %cst_121 = arith.constant 1.562500e-02 : f32
    %253 = vector.broadcast %cst_121 : f32 to vector<16x1xf32>
    %254 = arith.mulf %252, %253 : vector<16x1xf32>
    %255 = vector.broadcast %254 : vector<16x1xf32> to vector<16x128xf32>
    %256 = arith.subf %246, %255 : vector<16x128xf32>
    %257 = vector.broadcast %4 : vector<1x128xf32> to vector<16x128xf32>
    %258 = arith.mulf %256, %257 : vector<16x128xf32>
    %259 = arith.mulf %258, %258 : vector<16x128xf32>
    %cst_122 = arith.constant dense<0.000000e+00> : vector<16xf32>
    %260 = vector.multi_reduction <add>, %259, %cst_122 [1] : vector<16x128xf32> to vector<16xf32>
    %261 = vector.shape_cast %260 : vector<16xf32> to vector<16x1xf32>
    %cst_123 = arith.constant 1.562500e-02 : f32
    %262 = vector.broadcast %cst_123 : f32 to vector<16x1xf32>
    %263 = arith.mulf %261, %262 : vector<16x1xf32>
    %cst_124 = arith.constant 9.99999974E-6 : f32
    %264 = vector.broadcast %cst_124 : f32 to vector<16x1xf32>
    %265 = arith.addf %263, %264 : vector<16x1xf32>
    %266 = math.rsqrt %265 : vector<16x1xf32>
    %267 = vector.broadcast %266 : vector<16x1xf32> to vector<16x128xf32>
    %268 = arith.mulf %258, %267 : vector<16x128xf32>
    %269 = vector.broadcast %248 : vector<1x128xf32> to vector<16x128xf32>
    %270 = arith.mulf %268, %269 : vector<16x128xf32>
    %271 = vector.broadcast %250 : vector<1x128xf32> to vector<16x128xf32>
    %272 = arith.addf %270, %271 : vector<16x128xf32>
    %273 = tpu.concatenate %272, %164 in 1 : vector<16x128xf32>, vector<16x128xf32> -> vector<16x256xf32>
    %274 = arith.truncf %273 : vector<16x256xf32> to vector<16x256xbf16>
    %c1_125 = arith.constant 1 : index
    %c0_126 = arith.constant 0 : index
    %c0_127 = arith.constant 0 : index
    %275 = vector.load %arg14[%c1_125, %c0_126, %c0_127] : memref<2x256x128xbf16, #tpu.memory_space<vmem>>, vector<1x256x128xbf16>
    %276 = vector.shape_cast %275 : vector<1x256x128xbf16> to vector<256x128xbf16>
    %cst_128 = arith.constant dense<0.000000e+00> : vector<16x128xf32>
    %277 = tpu.matmul %274, %276, %cst_128 {dimension_numbers = #tpu.dot_dimension_numbers<[1], [0], [0], [1], [0, 0, 1, 1], [], []>} : vector<16x256xbf16>, vector<256x128xbf16>, vector<16x128xf32> -> vector<16x128xf32>
    %c1_129 = arith.constant 1 : index
    %c0_130 = arith.constant 0 : index
    %c0_131 = arith.constant 0 : index
    %278 = vector.load %arg15[%c1_129, %c0_130, %c0_131] : memref<2x1x128xf32, #tpu.memory_space<vmem>>, vector<1x1x128xf32>
    %279 = vector.shape_cast %278 : vector<1x1x128xf32> to vector<1x128xf32>
    %280 = vector.broadcast %279 : vector<1x128xf32> to vector<16x128xf32>
    %281 = arith.addf %277, %280 : vector<16x128xf32>
    %282 = arith.negf %281 : vector<16x128xf32>
    %283 = math.exp %282 : vector<16x128xf32>
    %cst_132 = arith.constant 1.000000e+00 : f32
    %284 = vector.broadcast %cst_132 : f32 to vector<16x128xf32>
    %285 = arith.addf %284, %283 : vector<16x128xf32>
    %286 = arith.divf %284, %285 : vector<16x128xf32>
    %287 = arith.subf %272, %164 : vector<16x128xf32>
    %288 = arith.mulf %286, %287 : vector<16x128xf32>
    %289 = arith.addf %164, %288 : vector<16x128xf32>
    %c0_133 = arith.constant 0 : index
    %c0_134 = arith.constant 0 : index
    %290 = vector.load %arg16[%c0_133, %c0_134] : memref<1x128xf32, #tpu.memory_space<vmem>>, vector<1x128xf32>
    %c0_135 = arith.constant 0 : index
    %c0_136 = arith.constant 0 : index
    %291 = vector.load %arg17[%c0_135, %c0_136] : memref<1x128xf32, #tpu.memory_space<vmem>>, vector<1x128xf32>
    %cst_137 = arith.constant dense<0.000000e+00> : vector<16xf32>
    %292 = vector.multi_reduction <add>, %289, %cst_137 [1] : vector<16x128xf32> to vector<16xf32>
    %293 = vector.shape_cast %292 : vector<16xf32> to vector<16x1xf32>
    %cst_138 = arith.constant 1.562500e-02 : f32
    %294 = vector.broadcast %cst_138 : f32 to vector<16x1xf32>
    %295 = arith.mulf %293, %294 : vector<16x1xf32>
    %296 = vector.broadcast %295 : vector<16x1xf32> to vector<16x128xf32>
    %297 = arith.subf %289, %296 : vector<16x128xf32>
    %298 = vector.broadcast %4 : vector<1x128xf32> to vector<16x128xf32>
    %299 = arith.mulf %297, %298 : vector<16x128xf32>
    %300 = arith.mulf %299, %299 : vector<16x128xf32>
    %cst_139 = arith.constant dense<0.000000e+00> : vector<16xf32>
    %301 = vector.multi_reduction <add>, %300, %cst_139 [1] : vector<16x128xf32> to vector<16xf32>
    %302 = vector.shape_cast %301 : vector<16xf32> to vector<16x1xf32>
    %cst_140 = arith.constant 1.562500e-02 : f32
    %303 = vector.broadcast %cst_140 : f32 to vector<16x1xf32>
    %304 = arith.mulf %302, %303 : vector<16x1xf32>
    %cst_141 = arith.constant 9.99999974E-6 : f32
    %305 = vector.broadcast %cst_141 : f32 to vector<16x1xf32>
    %306 = arith.addf %304, %305 : vector<16x1xf32>
    %307 = math.rsqrt %306 : vector<16x1xf32>
    %308 = vector.broadcast %307 : vector<16x1xf32> to vector<16x128xf32>
    %309 = arith.mulf %299, %308 : vector<16x128xf32>
    %310 = vector.broadcast %290 : vector<1x128xf32> to vector<16x128xf32>
    %311 = arith.mulf %309, %310 : vector<16x128xf32>
    %312 = vector.broadcast %291 : vector<1x128xf32> to vector<16x128xf32>
    %313 = arith.addf %311, %312 : vector<16x128xf32>
    %c0_142 = arith.constant 0 : index
    %c0_143 = arith.constant 0 : index
    %314 = vector.load %arg18[%c0_142, %c0_143] : memref<16x128xf32, #tpu.memory_space<vmem>>, vector<16x128xf32>
    tpu.vector_store %arg18[%c0_142, %c0_143], %313 {strides = array<i32>} : memref<16x128xf32, #tpu.memory_space<vmem>>, vector<16x128xf32>,
    return
  }
  func.func @transform_0(%arg0: i32) -> (i32, i32) {
    %c0_i32 = arith.constant 0 : i32
    %c0_i32_0 = arith.constant 0 : i32
    return %arg0, %c0_i32 : i32, i32
  }
  func.func @transform_1(%arg0: i32) -> (i32, i32) {
    %c0_i32 = arith.constant 0 : i32
    %c0_i32_0 = arith.constant 0 : i32
    %c0_i32_1 = arith.constant 0 : i32
    return %c0_i32, %c0_i32_0 : i32, i32
  }
  func.func @transform_2(%arg0: i32) -> (i32, i32) {
    %c0_i32 = arith.constant 0 : i32
    %c0_i32_0 = arith.constant 0 : i32
    %c0_i32_1 = arith.constant 0 : i32
    return %c0_i32, %c0_i32_0 : i32, i32
  }
  func.func @transform_3(%arg0: i32) -> (i32, i32) {
    %c0_i32 = arith.constant 0 : i32
    %c0_i32_0 = arith.constant 0 : i32
    %c0_i32_1 = arith.constant 0 : i32
    return %c0_i32, %c0_i32_0 : i32, i32
  }
  func.func @transform_4(%arg0: i32) -> (i32, i32) {
    %c0_i32 = arith.constant 0 : i32
    %c0_i32_0 = arith.constant 0 : i32
    %c0_i32_1 = arith.constant 0 : i32
    return %c0_i32, %c0_i32_0 : i32, i32
  }
  func.func @transform_5(%arg0: i32) -> (i32, i32, i32) {
    %c0_i32 = arith.constant 0 : i32
    %c0_i32_0 = arith.constant 0 : i32
    %c0_i32_1 = arith.constant 0 : i32
    %c0_i32_2 = arith.constant 0 : i32
    return %c0_i32, %c0_i32_0, %c0_i32_1 : i32, i32, i32
  }
  func.func @transform_6(%arg0: i32) -> (i32, i32, i32) {
    %c0_i32 = arith.constant 0 : i32
    %c0_i32_0 = arith.constant 0 : i32
    %c0_i32_1 = arith.constant 0 : i32
    %c0_i32_2 = arith.constant 0 : i32
    return %c0_i32, %c0_i32_0, %c0_i32_1 : i32, i32, i32
  }
  func.func @transform_7(%arg0: i32) -> (i32, i32, i32) {
    %c0_i32 = arith.constant 0 : i32
    %c0_i32_0 = arith.constant 0 : i32
    %c0_i32_1 = arith.constant 0 : i32
    %c0_i32_2 = arith.constant 0 : i32
    return %c0_i32, %c0_i32_0, %c0_i32_1 : i32, i32, i32
  }
  func.func @transform_8(%arg0: i32) -> (i32, i32, i32) {
    %c0_i32 = arith.constant 0 : i32
    %c0_i32_0 = arith.constant 0 : i32
    %c0_i32_1 = arith.constant 0 : i32
    %c0_i32_2 = arith.constant 0 : i32
    return %c0_i32, %c0_i32_0, %c0_i32_1 : i32, i32, i32
  }
  func.func @transform_9(%arg0: i32) -> (i32, i32, i32) {
    %c0_i32 = arith.constant 0 : i32
    %c0_i32_0 = arith.constant 0 : i32
    %c0_i32_1 = arith.constant 0 : i32
    %c0_i32_2 = arith.constant 0 : i32
    return %c0_i32, %c0_i32_0, %c0_i32_1 : i32, i32, i32
  }
  func.func @transform_10(%arg0: i32) -> (i32, i32, i32) {
    %c0_i32 = arith.constant 0 : i32
    %c0_i32_0 = arith.constant 0 : i32
    %c0_i32_1 = arith.constant 0 : i32
    %c0_i32_2 = arith.constant 0 : i32
    return %c0_i32, %c0_i32_0, %c0_i32_1 : i32, i32, i32
  }
  func.func @transform_11(%arg0: i32) -> (i32, i32, i32) {
    %c0_i32 = arith.constant 0 : i32
    %c0_i32_0 = arith.constant 0 : i32
    %c0_i32_1 = arith.constant 0 : i32
    %c0_i32_2 = arith.constant 0 : i32
    return %c0_i32, %c0_i32_0, %c0_i32_1 : i32, i32, i32
  }
  func.func @transform_12(%arg0: i32) -> (i32, i32, i32) {
    %c0_i32 = arith.constant 0 : i32
    %c0_i32_0 = arith.constant 0 : i32
    %c0_i32_1 = arith.constant 0 : i32
    %c0_i32_2 = arith.constant 0 : i32
    return %c0_i32, %c0_i32_0, %c0_i32_1 : i32, i32, i32
  }
  func.func @transform_13(%arg0: i32) -> (i32, i32, i32) {
    %c0_i32 = arith.constant 0 : i32
    %c0_i32_0 = arith.constant 0 : i32
    %c0_i32_1 = arith.constant 0 : i32
    %c0_i32_2 = arith.constant 0 : i32
    return %c0_i32, %c0_i32_0, %c0_i32_1 : i32, i32, i32
  }
  func.func @transform_14(%arg0: i32) -> (i32, i32, i32) {
    %c0_i32 = arith.constant 0 : i32
    %c0_i32_0 = arith.constant 0 : i32
    %c0_i32_1 = arith.constant 0 : i32
    %c0_i32_2 = arith.constant 0 : i32
    return %c0_i32, %c0_i32_0, %c0_i32_1 : i32, i32, i32
  }
  func.func @transform_15(%arg0: i32) -> (i32, i32) {
    %c0_i32 = arith.constant 0 : i32
    %c0_i32_0 = arith.constant 0 : i32
    %c0_i32_1 = arith.constant 0 : i32
    return %c0_i32, %c0_i32_0 : i32, i32
  }
  func.func @transform_16(%arg0: i32) -> (i32, i32) {
    %c0_i32 = arith.constant 0 : i32
    %c0_i32_0 = arith.constant 0 : i32
    %c0_i32_1 = arith.constant 0 : i32
    return %c0_i32, %c0_i32_0 : i32, i32
  }
  func.func @transform_17(%arg0: i32) -> (i32, i32) {
    %c0_i32 = arith.constant 0 : i32
    %c0_i32_0 = arith.constant 0 : i32
    return %arg0, %c0_i32 : i32, i32
  }
}

</mosaic_0001>

<llo_original>
// kernel: input_module_forward.1
$region0: #{input_module_forward.1}
  #allocation0 [shape = 'u32[]', space=smem, size = 0x4, offset = 0x4, fixed_abs, tag = 'smem constant byte address 0x4 - core index']
  #allocation1 [shape = 'u32[144,128]{1,0:T(1,128)}', space=vmem, size = 0x12000, scoped, tag = 'internal scratch']
  %s0 = inlined_call_operand.vmem [shape: bf16[16,32], index: 0, kind: input, shape index: {}]
  %s1 = inlined_call_operand.vmem [shape: bf16[32,128], index: 1, kind: input, shape index: {}]
  %s2 = inlined_call_operand.vmem [shape: f32[1,128], index: 2, kind: input, shape index: {}]
  %s3 = inlined_call_operand.vmem [shape: f32[1,128], index: 3, kind: input, shape index: {}]
  %s4 = inlined_call_operand.vmem [shape: f32[1,128], index: 4, kind: input, shape index: {}]
  %s5 = inlined_call_operand.vmem [shape: f32[2,1,128], index: 5, kind: input, shape index: {}]
  %s6 = inlined_call_operand.vmem [shape: f32[2,1,128], index: 6, kind: input, shape index: {}]
  %s7 = inlined_call_operand.hbm [shape: bf16[2,128,128], index: 7, kind: input, shape index: {}]
  %s8 = inlined_call_operand.vmem [shape: f32[2,1,128], index: 8, kind: input, shape index: {}]
  %s9 = inlined_call_operand.hbm [shape: bf16[2,128,128], index: 9, kind: input, shape index: {}]
  %s10 = inlined_call_operand.vmem [shape: f32[2,1,128], index: 10, kind: input, shape index: {}]
  %s11 = inlined_call_operand.vmem [shape: f32[2,1,128], index: 11, kind: input, shape index: {}]
  %s12 = inlined_call_operand.vmem [shape: f32[2,1,128], index: 12, kind: input, shape index: {}]
  %s13 = inlined_call_operand.hbm [shape: bf16[2,256,128], index: 13, kind: input, shape index: {}]
  %s14 = inlined_call_operand.vmem [shape: f32[2,1,128], index: 14, kind: input, shape index: {}]
  %s15 = inlined_call_operand.vmem [shape: f32[1,128], index: 15, kind: input, shape index: {}]
  %s16 = inlined_call_operand.vmem [shape: f32[1,128], index: 16, kind: input, shape index: {}]
  %s17 = inlined_call_operand.vmem [shape: f32[16,128], index: 17, kind: output, shape index: {}]
  %s18 = sld [smem:[#allocation0]]
  $region90: #{input_module_forward.1} parent=0
    _
  %s20 = ssub.s32 1, %s18
  %s21 = scalar_select 0, %s20, %s18
  $region1: #{input_module_forward.1} parent=0
    #allocation2 [shape = 'u8[65536]{0}', space=vmem, size = 0x10000, scoped, tag = 'input window, operand 7, single buffered']
    #allocation3 [shape = 's32[1]{0}', space=sflag, size = 0x4, scoped, tag = 'scoped memory for input_module_forward.1']
    #allocation4 [shape = 'u8[65536]{0}', space=vmem, size = 0x10000, scoped, tag = 'input window, operand 9, single buffered']
    #allocation5 [shape = 's32[1]{0}', space=sflag, size = 0x4, scoped, tag = 'scoped memory for input_module_forward.1']
    #allocation6 [shape = 'u8[131072]{0}', space=vmem, size = 0x20000, scoped, tag = 'input window, operand 13, single buffered']
    %22 = vsyncpa [#allocation3], 0
    %23 = vsyncpa [#allocation5], 0
    // Predicated region
    $region2: #{input_module_forward.1} parent=1 // pred_check
      _
    $region3: #{input_module_forward.1} parent=1 // pred_check_branch
      %25 = sbr.rel (0) target = $region5
    $region4: #{input_module_forward.1} parent=1 // pred_region
      _
    $region5: #{input_module_forward.1} parent=1 // pred_fallthru
      _
    // Predicated region
    $region6: #{input_module_forward.1} parent=1 // pred_check
      _
    $region7: #{input_module_forward.1} parent=1 // pred_check_branch
      %27 = sbr.rel (0) target = $region9
    $region8: #{input_module_forward.1} parent=1 // pred_region
      _
    $region9: #{input_module_forward.1} parent=1 // pred_fallthru
      _
    // Predicated region
    $region10: #{input_module_forward.1} parent=1 // pred_check
      _
    $region11: #{input_module_forward.1} parent=1 // pred_check_branch
      %29 = sbr.rel (0) target = $region13
    $region12: #{input_module_forward.1} parent=1 // pred_region
      _
    $region13: #{input_module_forward.1} parent=1 // pred_fallthru
      _
    // Predicated region
    $region14: #{input_module_forward.1} parent=1 // pred_check
      _
    $region15: #{input_module_forward.1} parent=1 // pred_check_branch
      %31 = sbr.rel (0) target = $region17
    $region16: #{input_module_forward.1} parent=1 // pred_region
      _
    $region17: #{input_module_forward.1} parent=1 // pred_fallthru
      _
    // Predicated region
    $region18: #{input_module_forward.1} parent=1 // pred_check
      _
    $region19: #{input_module_forward.1} parent=1 // pred_check_branch
      %33 = sbr.rel (0) target = $region21
    $region20: #{input_module_forward.1} parent=1 // pred_region
      _
    $region21: #{input_module_forward.1} parent=1 // pred_fallthru
      _
    // Predicated region
    $region22: #{input_module_forward.1} parent=1 // pred_check
      _
    $region23: #{input_module_forward.1} parent=1 // pred_check_branch
      %35 = sbr.rel (0) target = $region25
    $region24: #{input_module_forward.1} parent=1 // pred_region
      _
    $region25: #{input_module_forward.1} parent=1 // pred_fallthru
      _
    // Predicated region
    $region26: #{input_module_forward.1} parent=1 // pred_check
      _
    $region27: #{input_module_forward.1} parent=1 // pred_check_branch
      %37 = sbr.rel (0) target = $region29
    $region28: #{input_module_forward.1} parent=1 // pred_region
      _
    $region29: #{input_module_forward.1} parent=1 // pred_fallthru
      _
    // Predicated region
    $region30: #{input_module_forward.1} parent=1 // pred_check
      _
    $region31: #{input_module_forward.1} parent=1 // pred_check_branch
      %39 = sbr.rel (0) target = $region33
    $region32: #{input_module_forward.1} parent=1 // pred_region
      %s41 = ssub.s32 2048, 2048
      %42 = vsyncadd [#allocation3], %s41
      %s43 = sshll.u32 [#allocation2], 4
      %s44 = int_to_ptr.vmem [resolvable:$true] %s43
      %49 = dma.hbm_to_vmem [thread:$0]  %s7, 2048, %s44, [#allocation3], 64, 64, 4
    $region33: #{input_module_forward.1} parent=1 // pred_fallthru
      _
    // Predicated region
    $region34: #{input_module_forward.1} parent=1 // pred_check
      _
    $region35: #{input_module_forward.1} parent=1 // pred_check_branch
      %51 = sbr.rel (0) target = $region37
    $region36: #{input_module_forward.1} parent=1 // pred_region
      _
    $region37: #{input_module_forward.1} parent=1 // pred_fallthru
      _
    // Predicated region
    $region38: #{input_module_forward.1} parent=1 // pred_check
      _
    $region39: #{input_module_forward.1} parent=1 // pred_check_branch
      %53 = sbr.rel (0) target = $region41
    $region40: #{input_module_forward.1} parent=1 // pred_region
      %s55 = ssub.s32 2048, 2048
      %56 = vsyncadd [#allocation5], %s55
      %s57 = sshll.u32 [#allocation4], 4
      %s58 = int_to_ptr.vmem [resolvable:$true] %s57
      %63 = dma.hbm_to_vmem [thread:$0]  %s9, 2048, %s58, [#allocation5], 64, 64, 4
    $region41: #{input_module_forward.1} parent=1 // pred_fallthru
      _
    // Predicated region
    $region42: #{input_module_forward.1} parent=1 // pred_check
      _
    $region43: #{input_module_forward.1} parent=1 // pred_check_branch
      %65 = sbr.rel (0) target = $region45
    $region44: #{input_module_forward.1} parent=1 // pred_region
      _
    $region45: #{input_module_forward.1} parent=1 // pred_fallthru
      _
    // Predicated region
    $region46: #{input_module_forward.1} parent=1 // pred_check
      _
    $region47: #{input_module_forward.1} parent=1 // pred_check_branch
      %67 = sbr.rel (0) target = $region49
    $region48: #{input_module_forward.1} parent=1 // pred_region
      _
    $region49: #{input_module_forward.1} parent=1 // pred_fallthru
      _
    // Predicated region
    $region50: #{input_module_forward.1} parent=1 // pred_check
      _
    $region51: #{input_module_forward.1} parent=1 // pred_check_branch
      %69 = sbr.rel (0) target = $region53
    $region52: #{input_module_forward.1} parent=1 // pred_region
      _
    $region53: #{input_module_forward.1} parent=1 // pred_fallthru
      _
    // Predicated region
    $region54: #{input_module_forward.1} parent=1 // pred_check
      _
    $region55: #{input_module_forward.1} parent=1 // pred_check_branch
      %71 = sbr.rel (0) target = $region57
    $region56: #{input_module_forward.1} parent=1 // pred_region
      %s73 = ssub.s32 4096, 4096
      %74 = vsyncadd [#allocation5], %s73
      %s75 = sshll.u32 [#allocation6], 4
      %s76 = int_to_ptr.vmem [resolvable:$true] %s75
      %81 = dma.hbm_to_vmem [thread:$0]  %s13, 4096, %s76, [#allocation5], 64, 64, 4
    $region57: #{input_module_forward.1} parent=1 // pred_fallthru
      _
    // Predicated region
    $region58: #{input_module_forward.1} parent=1 // pred_check
      _
    $region59: #{input_module_forward.1} parent=1 // pred_check_branch
      %83 = sbr.rel (0) target = $region61
    $region60: #{input_module_forward.1} parent=1 // pred_region
      _
    $region61: #{input_module_forward.1} parent=1 // pred_fallthru
      _
    // Predicated region
    $region62: #{input_module_forward.1} parent=1 // pred_check
      _
    $region63: #{input_module_forward.1} parent=1 // pred_check_branch
      %85 = sbr.rel (0) target = $region65
    $region64: #{input_module_forward.1} parent=1 // pred_region
      _
    $region65: #{input_module_forward.1} parent=1 // pred_fallthru
      _
    // Predicated region
    $region66: #{input_module_forward.1} parent=1 // pred_check
      _
    $region67: #{input_module_forward.1} parent=1 // pred_check_branch
      %87 = sbr.rel (0) target = $region69
    $region68: #{input_module_forward.1} parent=1 // pred_region
      _
    $region69: #{input_module_forward.1} parent=1 // pred_fallthru
      _
    // Predicated region
    $region70: #{input_module_forward.1} parent=1 // pred_check
      _
    $region71: #{input_module_forward.1} parent=1 // pred_check_branch
      %89 = sbr.rel (0) target = $region73
    $region72: #{input_module_forward.1} parent=1 // pred_region
      %90 = dma.done [#allocation3], 2048
    $region73: #{input_module_forward.1} parent=1 // pred_fallthru
      _
    // Predicated region
    $region74: #{input_module_forward.1} parent=1 // pred_check
      _
    $region75: #{input_module_forward.1} parent=1 // pred_check_branch
      %92 = sbr.rel (0) target = $region77
    $region76: #{input_module_forward.1} parent=1 // pred_region
      %93 = dma.done [#allocation5], 2048
    $region77: #{input_module_forward.1} parent=1 // pred_fallthru
      _
    // Predicated region
    $region78: #{input_module_forward.1} parent=1 // pred_check
      _
    $region79: #{input_module_forward.1} parent=1 // pred_check_branch
      %95 = sbr.rel (0) target = $region81
    $region80: #{input_module_forward.1} parent=1 // pred_region
      %96 = dma.done [#allocation5], 4096
    $region81: #{input_module_forward.1} parent=1 // pred_fallthru
      _
    %v98 = vlaneseq
    %v99 = vand.u32 %v98, 127
    %vm100 = vcmp.lt.s32.totalorder %v99, 64
    %v101 = vsel %vm100, 1, 0
    %v102 = vcvt.s32.f32 %v101
    %v103 = vld [vmem:[%s0] sm:$0xf]
    %v104 = vld [vmem:[%s0 + $0x4] sm:$0xf]
    %v105 = vld [vmem:[%s1] sm:$0xf]
    %v106 = vld [vmem:[%s1 + $0x4] sm:$0xf]
    %v107 = vld [vmem:[%s1 + $0x8] sm:$0xf]
    %v108 = vld [vmem:[%s1 + $0xc] sm:$0xf]
    %v109 = vld [vmem:[%s2] sm:$0x1]
    %v111 = vlaneseq
    %v112 = vshrl.u32 %v111, 7
    %v113 = vsub.s32 0, %v112
    %v114 = vrot.slane %v109, %v113
    %v118 = vunpack.c.l.b16 %v103
    %v119 = vunpack.c.l.b16 %v104
    %v120 = vpack.c.b16 %v119, %v118
    %v125 = vunpack.c.l.b16 %v105
    %v126 = vunpack.c.l.b16 %v106
    %v127 = vunpack.c.l.b16 %v107
    %v128 = vunpack.c.l.b16 %v108
    %v129 = vpack.c.b16 %v126, %v125
    %v130 = vpack.c.b16 %v128, %v127
    %vm133 = vcmask 261120
    %v135 = vsel %vm133, %v120, 0
    %137 = vmatprep.subr.bf16.mxu0 0
    %138 = vmatpush1.bf16.msra.mxu0 %v129
    %139 = vmatprep.subr.bf16.mxu0 0
    %140 = vmatpush1.bf16.msra.mxu0 %v130
    %141 = vmatprep.subr.bf16.mxu0 0
    %142 = vmatpush1.bf16.msra.mxu0 0
    %143 = vmatprep.subr.bf16.mxu0 0
    %144 = vmatpush1.bf16.msra.mxu0 0
    %145 = vmatprep.subr.bf16.mxu0 0
    %146 = vmatpush1.bf16.msra.mxu0 0
    %147 = vmatprep.subr.bf16.mxu0 0
    %148 = vmatpush1.bf16.msra.mxu0 0
    %149 = vmatprep.subr.bf16.mxu0 0
    %150 = vmatpush1.bf16.msra.mxu0 0
    %151 = vmatprep.subr.bf16.mxu0 0
    %152 = vmatpush1.bf16.msra.mxu0 0
    %153 = vmatprep.subr.bf16.mxu0 0
    %154 = vmatpush1.bf16.msra.mxu0 0
    %155 = vmatprep.subr.bf16.mxu0 0
    %156 = vmatpush1.bf16.msra.mxu0 0
    %157 = vmatprep.subr.bf16.mxu0 0
    %158 = vmatpush1.bf16.msra.mxu0 0
    %159 = vmatprep.subr.bf16.mxu0 0
    %160 = vmatpush1.bf16.msra.mxu0 0
    %161 = vmatprep.subr.bf16.mxu0 0
    %162 = vmatpush1.bf16.msra.mxu0 0
    %163 = vmatprep.subr.bf16.mxu0 0
    %164 = vmatpush1.bf16.msra.mxu0 0
    %165 = vmatprep.subr.bf16.mxu0 0
    %166 = vmatpush1.bf16.msra.mxu0 0
    %167 = vmatprep.subr.bf16.mxu0 0
    %168 = vmatpush1.bf16.msra.mxu0 0
    %169 = vmatprep.mubr.bf16.mxu0 0
    %170 = vmatmul.mubr.bf16.gmra.mrb[0].mxu0 %v135
    %v171 = vpop.f32.mrb[0].mxu0
    %v172 = vadd.f32 %v114, %v171
    %v173 = vpop.f32.mrb[0].mxu0
    %v174 = vpop.f32.mrb[0].mxu0
    %v175 = vadd.f32 %v114, %v174
    %v176 = vpop.f32.mrb[0].mxu0
    %177 = vdwg.mxu0
    %vm178 = vcmp.ge.f32.partialorder %v172, 0.0
    %vm179 = vcmp.ge.f32.partialorder %v175, 0.0
    %v180 = vmul.f32 %v172, 0.01
    %v181 = vmul.f32 %v175, 0.01
    %v182 = vsel %vm178, %v172, %v180
    %v183 = vsel %vm179, %v175, %v181
    %v184 = vld [vmem:[%s3] sm:$0x1]
    %v185 = vld [vmem:[%s4] sm:$0x1]
    %186 = vadd.xlane.f32.xlu0 %v182
    %v187 = vpop.xlane.xlu0 %186
    %188 = vadd.xlane.f32.xlu0 %v183
    %v189 = vpop.xlane.xlu0 %188
    %v190 = vmul.f32 %v187, 0.015625
    %v191 = vmul.f32 %v189, 0.015625
    %v192 = vsub.f32 %v182, %v190
    %v193 = vsub.f32 %v183, %v191
    %v194 = vmul.f32 %v192, %v102
    %v195 = vmul.f32 %v193, %v102
    %v196 = vmul.f32 %v194, %v194
    %v197 = vmul.f32 %v195, %v195
    %198 = vadd.xlane.f32.xlu0 %v196
    %v199 = vpop.xlane.xlu0 %198
    %200 = vadd.xlane.f32.xlu0 %v197
    %v201 = vpop.xlane.xlu0 %200
    %v202 = vmul.f32 %v199, 0.015625
    %v203 = vmul.f32 %v201, 0.015625
    %v204 = vadd.f32 %v202, 1e-05
    %v205 = vadd.f32 %v203, 1e-05
    %v206 = vrsqrt.pop %v204
    %v207 = vrsqrt.pop %v205
    %v208 = vmul.f32 %v194, %v206
    %v209 = vmul.f32 %v195, %v207
    %v211 = vlaneseq
    %v212 = vshrl.u32 %v211, 7
    %v213 = vsub.s32 0, %v212
    %v214 = vrot.slane %v184, %v213
    %v216 = vmul.f32 %v208, %v214
    %v217 = vmul.f32 %v209, %v214
    %v219 = vlaneseq
    %v220 = vshrl.u32 %v219, 7
    %v221 = vsub.s32 0, %v220
    %v222 = vrot.slane %v185, %v221
    %v224 = vadd.f32 %v216, %v222
    %v225 = vadd.f32 %v217, %v222
    %v226 = vld [vmem:[%s5] sm:$0x1]
    %v227 = vld [vmem:[%s6] sm:$0x1]
    %228 = vadd.xlane.f32.xlu0 %v224
    %v229 = vpop.xlane.xlu0 %228
    %230 = vadd.xlane.f32.xlu0 %v225
    %v231 = vpop.xlane.xlu0 %230
    %v232 = vmul.f32 %v229, 0.015625
    %v233 = vmul.f32 %v231, 0.015625
    %v234 = vsub.f32 %v224, %v232
    %v235 = vsub.f32 %v225, %v233
    %v236 = vmul.f32 %v234, %v102
    %v237 = vmul.f32 %v235, %v102
    %v238 = vmul.f32 %v236, %v236
    %v239 = vmul.f32 %v237, %v237
    %240 = vadd.xlane.f32.xlu0 %v238
    %v241 = vpop.xlane.xlu0 %240
    %242 = vadd.xlane.f32.xlu0 %v239
    %v243 = vpop.xlane.xlu0 %242
    %v244 = vmul.f32 %v241, 0.015625
    %v245 = vmul.f32 %v243, 0.015625
    %v246 = vadd.f32 %v244, 1e-05
    %v247 = vadd.f32 %v245, 1e-05
    %v248 = vrsqrt.pop %v246
    %v249 = vrsqrt.pop %v247
    %v250 = vmul.f32 %v236, %v248
    %v251 = vmul.f32 %v237, %v249
    %v253 = vlaneseq
    %v254 = vshrl.u32 %v253, 7
    %v255 = vsub.s32 0, %v254
    %v256 = vrot.slane %v226, %v255
    %v258 = vmul.f32 %v250, %v256
    %v259 = vmul.f32 %v251, %v256
    %v261 = vlaneseq
    %v262 = vshrl.u32 %v261, 7
    %v263 = vsub.s32 0, %v262
    %v264 = vrot.slane %v227, %v263
    %v266 = vadd.f32 %v258, %v264
    %v267 = vadd.f32 %v259, %v264
    %v268 = vpack.c.bf16 %v267, %v266
    %v269 = vld [vmem:[#allocation2] sm:$0xf]
    %v270 = vld [vmem:[#allocation2 + $0x4] sm:$0xf]
    %v271 = vld [vmem:[#allocation2 + $0x8] sm:$0xf]
    %v272 = vld [vmem:[#allocation2 + $0xc] sm:$0xf]
    %v273 = vld [vmem:[#allocation2 + $0x10] sm:$0xf]
    %v274 = vld [vmem:[#allocation2 + $0x14] sm:$0xf]
    %v275 = vld [vmem:[#allocation2 + $0x18] sm:$0xf]
    %v276 = vld [vmem:[#allocation2 + $0x1c] sm:$0xf]
    %v277 = vld [vmem:[#allocation2 + $0x20] sm:$0xf]
    %v278 = vld [vmem:[#allocation2 + $0x24] sm:$0xf]
    %v279 = vld [vmem:[#allocation2 + $0x28] sm:$0xf]
    %v280 = vld [vmem:[#allocation2 + $0x2c] sm:$0xf]
    %v281 = vld [vmem:[#allocation2 + $0x30] sm:$0xf]
    %v282 = vld [vmem:[#allocation2 + $0x34] sm:$0xf]
    %v283 = vld [vmem:[#allocation2 + $0x38] sm:$0xf]
    %v284 = vld [vmem:[#allocation2 + $0x3c] sm:$0xf]
    %v285 = vld [vmem:[%s8] sm:$0x1]
    %v287 = vlaneseq
    %v288 = vshrl.u32 %v287, 7
    %v289 = vsub.s32 0, %v288
    %v290 = vrot.slane %v285, %v289
    %v308 = vunpack.c.l.b16 %v269
    %v309 = vunpack.c.l.b16 %v270
    %v310 = vunpack.c.l.b16 %v271
    %v311 = vunpack.c.l.b16 %v272
    %v312 = vunpack.c.l.b16 %v273
    %v313 = vunpack.c.l.b16 %v274
    %v314 = vunpack.c.l.b16 %v275
    %v315 = vunpack.c.l.b16 %v276
    %v316 = vunpack.c.l.b16 %v277
    %v317 = vunpack.c.l.b16 %v278
    %v318 = vunpack.c.l.b16 %v279
    %v319 = vunpack.c.l.b16 %v280
    %v320 = vunpack.c.l.b16 %v281
    %v321 = vunpack.c.l.b16 %v282
    %v322 = vunpack.c.l.b16 %v283
    %v323 = vunpack.c.l.b16 %v284
    %v324 = vpack.c.b16 %v309, %v308
    %v325 = vpack.c.b16 %v311, %v310
    %v326 = vpack.c.b16 %v313, %v312
    %v327 = vpack.c.b16 %v315, %v314
    %v328 = vpack.c.b16 %v317, %v316
    %v329 = vpack.c.b16 %v319, %v318
    %v330 = vpack.c.b16 %v321, %v320
    %v331 = vpack.c.b16 %v323, %v322
    %340 = vmatprep.subr.bf16.mxu0 0
    %341 = vmatpush1.bf16.msra.mxu0 %v324
    %342 = vmatprep.subr.bf16.mxu0 0
    %343 = vmatpush1.bf16.msra.mxu0 %v325
    %344 = vmatprep.subr.bf16.mxu0 0
    %345 = vmatpush1.bf16.msra.mxu0 %v326
    %346 = vmatprep.subr.bf16.mxu0 0
    %347 = vmatpush1.bf16.msra.mxu0 %v327
    %348 = vmatprep.subr.bf16.mxu0 0
    %349 = vmatpush1.bf16.msra.mxu0 %v328
    %350 = vmatprep.subr.bf16.mxu0 0
    %351 = vmatpush1.bf16.msra.mxu0 %v329
    %352 = vmatprep.subr.bf16.mxu0 0
    %353 = vmatpush1.bf16.msra.mxu0 %v330
    %354 = vmatprep.subr.bf16.mxu0 0
    %355 = vmatpush1.bf16.msra.mxu0 %v331
    %356 = vmatprep.subr.bf16.mxu0 0
    %357 = vmatpush1.bf16.msra.mxu0 0
    %358 = vmatprep.subr.bf16.mxu0 0
    %359 = vmatpush1.bf16.msra.mxu0 0
    %360 = vmatprep.subr.bf16.mxu0 0
    %361 = vmatpush1.bf16.msra.mxu0 0
    %362 = vmatprep.subr.bf16.mxu0 0
    %363 = vmatpush1.bf16.msra.mxu0 0
    %364 = vmatprep.subr.bf16.mxu0 0
    %365 = vmatpush1.bf16.msra.mxu0 0
    %366 = vmatprep.subr.bf16.mxu0 0
    %367 = vmatpush1.bf16.msra.mxu0 0
    %368 = vmatprep.subr.bf16.mxu0 0
    %369 = vmatpush1.bf16.msra.mxu0 0
    %370 = vmatprep.subr.bf16.mxu0 0
    %371 = vmatpush1.bf16.msra.mxu0 0
    %372 = vmatprep.mubr.bf16.mxu0 0
    %373 = vmatmul.mubr.bf16.gmra.mrb[0].mxu0 %v268
    %v374 = vpop.f32.mrb[0].mxu0
    %v375 = vadd.f32 %v290, %v374
    %v376 = vpop.f32.mrb[0].mxu0
    %v377 = vpop.f32.mrb[0].mxu0
    %v378 = vadd.f32 %v290, %v377
    %v379 = vpop.f32.mrb[0].mxu0
    %380 = vdwg.mxu0
    %v381 = vmul.f32 %v375, 0.70710677
    %v382 = vmul.f32 %v378, 0.70710677
    %vm383 = vcmp.ge.f32.partialorder %v381, 0.0
    %vm384 = vcmp.ge.f32.partialorder %v382, 0.0
    %v385 = vsel %vm383, 1.0, -1.0
    %v386 = vsel %vm384, 1.0, -1.0
    %v387 = vand.u32 2147483647, %v381
    %v388 = vand.u32 2147483647, %v382
    %v389 = vmul.f32 %v387, 0.3275911
    %v390 = vmul.f32 %v388, 0.3275911
    %v391 = vadd.f32 %v389, 1.0
    %v392 = vadd.f32 %v390, 1.0
    %v393 = vrcp.pop %v391
    %v394 = vrcp.pop %v392
    %v395 = vmul.f32 %v393, 1.0614054
    %v396 = vmul.f32 %v394, 1.0614054
    %v397 = vadd.f32 %v395, -1.4531521
    %v398 = vadd.f32 %v396, -1.4531521
    %v399 = vmul.f32 %v397, %v393
    %v400 = vmul.f32 %v398, %v394
    %v401 = vadd.f32 %v399, 1.4214138
    %v402 = vadd.f32 %v400, 1.4214138
    %v403 = vmul.f32 %v401, %v393
    %v404 = vmul.f32 %v402, %v394
    %v405 = vadd.f32 %v403, -0.28449672
    %v406 = vadd.f32 %v404, -0.28449672
    %v407 = vmul.f32 %v405, %v393
    %v408 = vmul.f32 %v406, %v394
    %v409 = vadd.f32 %v407, 0.2548296
    %v410 = vadd.f32 %v408, 0.2548296
    %v411 = vmul.f32 %v409, %v393
    %v412 = vmul.f32 %v410, %v394
    %v413 = vsub.f32 0.0, %v387
    %v414 = vsub.f32 0.0, %v388
    %v415 = vmul.f32 %v413, %v387
    %v416 = vmul.f32 %v414, %v388
    %v417 = vmul.f32 %v415, 1.442695
    %v418 = vpow.pop %v417
    %v419 = vmul.f32 %v416, 1.442695
    %v420 = vpow.pop %v419
    %v421 = vmul.f32 %v411, %v418
    %v422 = vmul.f32 %v412, %v420
    %v423 = vsub.f32 1.0, %v421
    %v424 = vsub.f32 1.0, %v422
    %v425 = vmul.f32 %v385, %v423
    %v426 = vmul.f32 %v386, %v424
    %v427 = vmul.f32 %v375, 0.5
    %v428 = vmul.f32 %v378, 0.5
    %v429 = vadd.f32 %v425, 1.0
    %v430 = vadd.f32 %v426, 1.0
    %v431 = vmul.f32 %v427, %v429
    %v432 = vmul.f32 %v428, %v430
    %v433 = vpack.c.bf16 %v432, %v431
    %v434 = vld [vmem:[#allocation4] sm:$0xf]
    %v435 = vld [vmem:[#allocation4 + $0x4] sm:$0xf]
    %v436 = vld [vmem:[#allocation4 + $0x8] sm:$0xf]
    %v437 = vld [vmem:[#allocation4 + $0xc] sm:$0xf]
    %v438 = vld [vmem:[#allocation4 + $0x10] sm:$0xf]
    %v439 = vld [vmem:[#allocation4 + $0x14] sm:$0xf]
    %v440 = vld [vmem:[#allocation4 + $0x18] sm:$0xf]
    %v441 = vld [vmem:[#allocation4 + $0x1c] sm:$0xf]
    %v442 = vld [vmem:[#allocation4 + $0x20] sm:$0xf]
    %v443 = vld [vmem:[#allocation4 + $0x24] sm:$0xf]
    %v444 = vld [vmem:[#allocation4 + $0x28] sm:$0xf]
    %v445 = vld [vmem:[#allocation4 + $0x2c] sm:$0xf]
    %v446 = vld [vmem:[#allocation4 + $0x30] sm:$0xf]
    %v447 = vld [vmem:[#allocation4 + $0x34] sm:$0xf]
    %v448 = vld [vmem:[#allocation4 + $0x38] sm:$0xf]
    %v449 = vld [vmem:[#allocation4 + $0x3c] sm:$0xf]
    %v450 = vld [vmem:[%s10] sm:$0x1]
    %v452 = vlaneseq
    %v453 = vshrl.u32 %v452, 7
    %v454 = vsub.s32 0, %v453
    %v455 = vrot.slane %v450, %v454
    %v473 = vunpack.c.l.b16 %v434
    %v474 = vunpack.c.l.b16 %v435
    %v475 = vunpack.c.l.b16 %v436
    %v476 = vunpack.c.l.b16 %v437
    %v477 = vunpack.c.l.b16 %v438
    %v478 = vunpack.c.l.b16 %v439
    %v479 = vunpack.c.l.b16 %v440
    %v480 = vunpack.c.l.b16 %v441
    %v481 = vunpack.c.l.b16 %v442
    %v482 = vunpack.c.l.b16 %v443
    %v483 = vunpack.c.l.b16 %v444
    %v484 = vunpack.c.l.b16 %v445
    %v485 = vunpack.c.l.b16 %v446
    %v486 = vunpack.c.l.b16 %v447
    %v487 = vunpack.c.l.b16 %v448
    %v488 = vunpack.c.l.b16 %v449
    %v489 = vpack.c.b16 %v474, %v473
    %v490 = vpack.c.b16 %v476, %v475
    %v491 = vpack.c.b16 %v478, %v477
    %v492 = vpack.c.b16 %v480, %v479
    %v493 = vpack.c.b16 %v482, %v481
    %v494 = vpack.c.b16 %v484, %v483
    %v495 = vpack.c.b16 %v486, %v485
    %v496 = vpack.c.b16 %v488, %v487
    %505 = vmatprep.subr.bf16.mxu0 0
    %506 = vmatpush1.bf16.msra.mxu0 %v489
    %507 = vmatprep.subr.bf16.mxu0 0
    %508 = vmatpush1.bf16.msra.mxu0 %v490
    %509 = vmatprep.subr.bf16.mxu0 0
    %510 = vmatpush1.bf16.msra.mxu0 %v491
    %511 = vmatprep.subr.bf16.mxu0 0
    %512 = vmatpush1.bf16.msra.mxu0 %v492
    %513 = vmatprep.subr.bf16.mxu0 0
    %514 = vmatpush1.bf16.msra.mxu0 %v493
    %515 = vmatprep.subr.bf16.mxu0 0
    %516 = vmatpush1.bf16.msra.mxu0 %v494
    %517 = vmatprep.subr.bf16.mxu0 0
    %518 = vmatpush1.bf16.msra.mxu0 %v495
    %519 = vmatprep.subr.bf16.mxu0 0
    %520 = vmatpush1.bf16.msra.mxu0 %v496
    %521 = vmatprep.subr.bf16.mxu0 0
    %522 = vmatpush1.bf16.msra.mxu0 0
    %523 = vmatprep.subr.bf16.mxu0 0
    %524 = vmatpush1.bf16.msra.mxu0 0
    %525 = vmatprep.subr.bf16.mxu0 0
    %526 = vmatpush1.bf16.msra.mxu0 0
    %527 = vmatprep.subr.bf16.mxu0 0
    %528 = vmatpush1.bf16.msra.mxu0 0
    %529 = vmatprep.subr.bf16.mxu0 0
    %530 = vmatpush1.bf16.msra.mxu0 0
    %531 = vmatprep.subr.bf16.mxu0 0
    %532 = vmatpush1.bf16.msra.mxu0 0
    %533 = vmatprep.subr.bf16.mxu0 0
    %534 = vmatpush1.bf16.msra.mxu0 0
    %535 = vmatprep.subr.bf16.mxu0 0
    %536 = vmatpush1.bf16.msra.mxu0 0
    %537 = vmatprep.mubr.bf16.mxu0 0
    %538 = vmatmul.mubr.bf16.gmra.mrb[0].mxu0 %v433
    %v539 = vpop.f32.mrb[0].mxu0
    %v540 = vadd.f32 %v455, %v539
    %v541 = vpop.f32.mrb[0].mxu0
    %v542 = vpop.f32.mrb[0].mxu0
    %v543 = vadd.f32 %v455, %v542
    %v544 = vpop.f32.mrb[0].mxu0
    %545 = vdwg.mxu0
    %v546 = vld [vmem:[%s11] sm:$0x1]
    %v547 = vld [vmem:[%s12] sm:$0x1]
    %548 = vadd.xlane.f32.xlu0 %v540
    %v549 = vpop.xlane.xlu0 %548
    %550 = vadd.xlane.f32.xlu0 %v543
    %v551 = vpop.xlane.xlu0 %550
    %v552 = vmul.f32 %v549, 0.015625
    %v553 = vmul.f32 %v551, 0.015625
    %v554 = vsub.f32 %v540, %v552
    %v555 = vsub.f32 %v543, %v553
    %v556 = vmul.f32 %v554, %v102
    %v557 = vmul.f32 %v555, %v102
    %v558 = vmul.f32 %v556, %v556
    %v559 = vmul.f32 %v557, %v557
    %560 = vadd.xlane.f32.xlu0 %v558
    %v561 = vpop.xlane.xlu0 %560
    %562 = vadd.xlane.f32.xlu0 %v559
    %v563 = vpop.xlane.xlu0 %562
    %v564 = vmul.f32 %v561, 0.015625
    %v565 = vmul.f32 %v563, 0.015625
    %v566 = vadd.f32 %v564, 1e-05
    %v567 = vadd.f32 %v565, 1e-05
    %v568 = vrsqrt.pop %v566
    %v569 = vrsqrt.pop %v567
    %v570 = vmul.f32 %v556, %v568
    %v571 = vmul.f32 %v557, %v569
    %v573 = vlaneseq
    %v574 = vshrl.u32 %v573, 7
    %v575 = vsub.s32 0, %v574
    %v576 = vrot.slane %v546, %v575
    %v578 = vmul.f32 %v570, %v576
    %v579 = vmul.f32 %v571, %v576
    %v581 = vlaneseq
    %v582 = vshrl.u32 %v581, 7
    %v583 = vsub.s32 0, %v582
    %v584 = vrot.slane %v547, %v583
    %v586 = vadd.f32 %v578, %v584
    %v587 = vadd.f32 %v579, %v584
    %v588 = vpack.c.bf16 %v587, %v586
    %v589 = vpack.c.bf16 %v225, %v224
    %v590 = vld [vmem:[#allocation6] sm:$0xf]
    %v591 = vld [vmem:[#allocation6 + $0x4] sm:$0xf]
    %v592 = vld [vmem:[#allocation6 + $0x8] sm:$0xf]
    %v593 = vld [vmem:[#allocation6 + $0xc] sm:$0xf]
    %v594 = vld [vmem:[#allocation6 + $0x10] sm:$0xf]
    %v595 = vld [vmem:[#allocation6 + $0x14] sm:$0xf]
    %v596 = vld [vmem:[#allocation6 + $0x18] sm:$0xf]
    %v597 = vld [vmem:[#allocation6 + $0x1c] sm:$0xf]
    %v598 = vld [vmem:[#allocation6 + $0x20] sm:$0xf]
    %v599 = vld [vmem:[#allocation6 + $0x24] sm:$0xf]
    %v600 = vld [vmem:[#allocation6 + $0x28] sm:$0xf]
    %v601 = vld [vmem:[#allocation6 + $0x2c] sm:$0xf]
    %v602 = vld [vmem:[#allocation6 + $0x30] sm:$0xf]
    %v603 = vld [vmem:[#allocation6 + $0x34] sm:$0xf]
    %v604 = vld [vmem:[#allocation6 + $0x38] sm:$0xf]
    %v605 = vld [vmem:[#allocation6 + $0x3c] sm:$0xf]
    %v606 = vld [vmem:[#allocation6 + $0x40] sm:$0xf]
    %v607 = vld [vmem:[#allocation6 + $0x44] sm:$0xf]
    %v608 = vld [vmem:[#allocation6 + $0x48] sm:$0xf]
    %v609 = vld [vmem:[#allocation6 + $0x4c] sm:$0xf]
    %v610 = vld [vmem:[#allocation6 + $0x50] sm:$0xf]
    %v611 = vld [vmem:[#allocation6 + $0x54] sm:$0xf]
    %v612 = vld [vmem:[#allocation6 + $0x58] sm:$0xf]
    %v613 = vld [vmem:[#allocation6 + $0x5c] sm:$0xf]
    %v614 = vld [vmem:[#allocation6 + $0x60] sm:$0xf]
    %v615 = vld [vmem:[#allocation6 + $0x64] sm:$0xf]
    %v616 = vld [vmem:[#allocation6 + $0x68] sm:$0xf]
    %v617 = vld [vmem:[#allocation6 + $0x6c] sm:$0xf]
    %v618 = vld [vmem:[#allocation6 + $0x70] sm:$0xf]
    %v619 = vld [vmem:[#allocation6 + $0x74] sm:$0xf]
    %v620 = vld [vmem:[#allocation6 + $0x78] sm:$0xf]
    %v621 = vld [vmem:[#allocation6 + $0x7c] sm:$0xf]
    %v622 = vld [vmem:[%s14] sm:$0x1]
    %v624 = vlaneseq
    %v625 = vshrl.u32 %v624, 7
    %v626 = vsub.s32 0, %v625
    %v627 = vrot.slane %v622, %v626
    %v661 = vunpack.c.l.b16 %v590
    %v662 = vunpack.c.l.b16 %v591
    %v663 = vunpack.c.l.b16 %v592
    %v664 = vunpack.c.l.b16 %v593
    %v665 = vunpack.c.l.b16 %v594
    %v666 = vunpack.c.l.b16 %v595
    %v667 = vunpack.c.l.b16 %v596
    %v668 = vunpack.c.l.b16 %v597
    %v669 = vunpack.c.l.b16 %v598
    %v670 = vunpack.c.l.b16 %v599
    %v671 = vunpack.c.l.b16 %v600
    %v672 = vunpack.c.l.b16 %v601
    %v673 = vunpack.c.l.b16 %v602
    %v674 = vunpack.c.l.b16 %v603
    %v675 = vunpack.c.l.b16 %v604
    %v676 = vunpack.c.l.b16 %v605
    %v677 = vunpack.c.l.b16 %v606
    %v678 = vunpack.c.l.b16 %v607
    %v679 = vunpack.c.l.b16 %v608
    %v680 = vunpack.c.l.b16 %v609
    %v681 = vunpack.c.l.b16 %v610
    %v682 = vunpack.c.l.b16 %v611
    %v683 = vunpack.c.l.b16 %v612
    %v684 = vunpack.c.l.b16 %v613
    %v685 = vunpack.c.l.b16 %v614
    %v686 = vunpack.c.l.b16 %v615
    %v687 = vunpack.c.l.b16 %v616
    %v688 = vunpack.c.l.b16 %v617
    %v689 = vunpack.c.l.b16 %v618
    %v690 = vunpack.c.l.b16 %v619
    %v691 = vunpack.c.l.b16 %v620
    %v692 = vunpack.c.l.b16 %v621
    %v693 = vpack.c.b16 %v662, %v661
    %v694 = vpack.c.b16 %v664, %v663
    %v695 = vpack.c.b16 %v666, %v665
    %v696 = vpack.c.b16 %v668, %v667
    %v697 = vpack.c.b16 %v670, %v669
    %v698 = vpack.c.b16 %v672, %v671
    %v699 = vpack.c.b16 %v674, %v673
    %v700 = vpack.c.b16 %v676, %v675
    %v701 = vpack.c.b16 %v678, %v677
    %v702 = vpack.c.b16 %v680, %v679
    %v703 = vpack.c.b16 %v682, %v681
    %v704 = vpack.c.b16 %v684, %v683
    %v705 = vpack.c.b16 %v686, %v685
    %v706 = vpack.c.b16 %v688, %v687
    %v707 = vpack.c.b16 %v690, %v689
    %v708 = vpack.c.b16 %v692, %v691
    %725 = vmatprep.subr.bf16.mxu0 0
    %726 = vmatpush1.bf16.msra.mxu0 %v693
    %727 = vmatprep.subr.bf16.mxu0 0
    %728 = vmatpush1.bf16.msra.mxu0 %v694
    %729 = vmatprep.subr.bf16.mxu0 0
    %730 = vmatpush1.bf16.msra.mxu0 %v695
    %731 = vmatprep.subr.bf16.mxu0 0
    %732 = vmatpush1.bf16.msra.mxu0 %v696
    %733 = vmatprep.subr.bf16.mxu0 0
    %734 = vmatpush1.bf16.msra.mxu0 %v697
    %735 = vmatprep.subr.bf16.mxu0 0
    %736 = vmatpush1.bf16.msra.mxu0 %v698
    %737 = vmatprep.subr.bf16.mxu0 0
    %738 = vmatpush1.bf16.msra.mxu0 %v699
    %739 = vmatprep.subr.bf16.mxu0 0
    %740 = vmatpush1.bf16.msra.mxu0 %v700
    %741 = vmatprep.subr.bf16.mxu0 0
    %742 = vmatpush1.bf16.msra.mxu0 %v701
    %743 = vmatprep.subr.bf16.mxu0 0
    %744 = vmatpush1.bf16.msra.mxu0 %v702
    %745 = vmatprep.subr.bf16.mxu0 0
    %746 = vmatpush1.bf16.msra.mxu0 %v703
    %747 = vmatprep.subr.bf16.mxu0 0
    %748 = vmatpush1.bf16.msra.mxu0 %v704
    %749 = vmatprep.subr.bf16.mxu0 0
    %750 = vmatpush1.bf16.msra.mxu0 %v705
    %751 = vmatprep.subr.bf16.mxu0 0
    %752 = vmatpush1.bf16.msra.mxu0 %v706
    %753 = vmatprep.subr.bf16.mxu0 0
    %754 = vmatpush1.bf16.msra.mxu0 %v707
    %755 = vmatprep.subr.bf16.mxu0 0
    %756 = vmatpush1.bf16.msra.mxu0 %v708
    %757 = vmatprep.mubr.bf16.mxu0 %v589
    %758 = vmatmul.mubr.bf16.gmra.mrb[0].mxu0 %v588
    %v759 = vpop.f32.mrb[0].mxu0
    %v760 = vadd.f32 %v627, %v759
    %v761 = vpop.f32.mrb[0].mxu0
    %v762 = vpop.f32.mrb[0].mxu0
    %v763 = vadd.f32 %v627, %v762
    %v764 = vpop.f32.mrb[0].mxu0
    %765 = vdwg.mxu0
    %v766 = vxor.u32 %v760, 2147483648
    %v767 = vxor.u32 %v763, 2147483648
    %v768 = vmul.f32 %v766, 1.442695
    %v769 = vpow.pop %v768
    %v770 = vmul.f32 %v767, 1.442695
    %v771 = vpow.pop %v770
    %v772 = vadd.f32 %v769, 1.0
    %v773 = vadd.f32 %v771, 1.0
    %v774 = vrcp.pop %v772
    %v775 = vmul.f32 1.0, %v774
    %v776 = vrcp.pop %v773
    %v777 = vmul.f32 1.0, %v776
    %v778 = vsub.f32 %v586, %v224
    %v779 = vsub.f32 %v587, %v225
    %v780 = vmul.f32 %v775, %v778
    %v781 = vmul.f32 %v777, %v779
    %v782 = vadd.f32 %v224, %v780
    %v783 = vadd.f32 %v225, %v781
    %s784 = scalar_lea.vmem %s5, 1
    %v785 = vld [vmem:[%s784] sm:$0x1]
    %s786 = scalar_lea.vmem %s6, 1
    %v787 = vld [vmem:[%s786] sm:$0x1]
    %788 = vadd.xlane.f32.xlu0 %v782
    %v789 = vpop.xlane.xlu0 %788
    %790 = vadd.xlane.f32.xlu0 %v783
    %v791 = vpop.xlane.xlu0 %790
    %v792 = vmul.f32 %v789, 0.015625
    %v793 = vmul.f32 %v791, 0.015625
    %v794 = vsub.f32 %v782, %v792
    %v795 = vsub.f32 %v783, %v793
    %v796 = vmul.f32 %v794, %v102
    %v797 = vmul.f32 %v795, %v102
    %v798 = vmul.f32 %v796, %v796
    %v799 = vmul.f32 %v797, %v797
    %800 = vadd.xlane.f32.xlu0 %v798
    %v801 = vpop.xlane.xlu0 %800
    %802 = vadd.xlane.f32.xlu0 %v799
    %v803 = vpop.xlane.xlu0 %802
    %v804 = vmul.f32 %v801, 0.015625
    %v805 = vmul.f32 %v803, 0.015625
    %v806 = vadd.f32 %v804, 1e-05
    %v807 = vadd.f32 %v805, 1e-05
    %v808 = vrsqrt.pop %v806
    %v809 = vrsqrt.pop %v807
    %v810 = vmul.f32 %v796, %v808
    %v811 = vmul.f32 %v797, %v809
    %v813 = vlaneseq
    %v814 = vshrl.u32 %v813, 7
    %v815 = vsub.s32 0, %v814
    %v816 = vrot.slane %v785, %v815
    %v818 = vmul.f32 %v810, %v816
    %v819 = vmul.f32 %v811, %v816
    %v821 = vlaneseq
    %v822 = vshrl.u32 %v821, 7
    %v823 = vsub.s32 0, %v822
    %v824 = vrot.slane %v787, %v823
    %v826 = vadd.f32 %v818, %v824
    %v827 = vadd.f32 %v819, %v824
    %v828 = vpack.c.bf16 %v827, %v826
    %s829 = scalar_lea.vmem [#allocation2], 64
    %v830 = vld [vmem:[%s829] sm:$0xf]
    %v831 = vld [vmem:[%s829 + $0x4] sm:$0xf]
    %v832 = vld [vmem:[%s829 + $0x8] sm:$0xf]
    %v833 = vld [vmem:[%s829 + $0xc] sm:$0xf]
    %v834 = vld [vmem:[%s829 + $0x10] sm:$0xf]
    %v835 = vld [vmem:[%s829 + $0x14] sm:$0xf]
    %v836 = vld [vmem:[%s829 + $0x18] sm:$0xf]
    %v837 = vld [vmem:[%s829 + $0x1c] sm:$0xf]
    %v838 = vld [vmem:[%s829 + $0x20] sm:$0xf]
    %v839 = vld [vmem:[%s829 + $0x24] sm:$0xf]
    %v840 = vld [vmem:[%s829 + $0x28] sm:$0xf]
    %v841 = vld [vmem:[%s829 + $0x2c] sm:$0xf]
    %v842 = vld [vmem:[%s829 + $0x30] sm:$0xf]
    %v843 = vld [vmem:[%s829 + $0x34] sm:$0xf]
    %v844 = vld [vmem:[%s829 + $0x38] sm:$0xf]
    %v845 = vld [vmem:[%s829 + $0x3c] sm:$0xf]
    %s846 = scalar_lea.vmem %s8, 1
    %v847 = vld [vmem:[%s846] sm:$0x1]
    %v849 = vlaneseq
    %v850 = vshrl.u32 %v849, 7
    %v851 = vsub.s32 0, %v850
    %v852 = vrot.slane %v847, %v851
    %v870 = vunpack.c.l.b16 %v830
    %v871 = vunpack.c.l.b16 %v831
    %v872 = vunpack.c.l.b16 %v832
    %v873 = vunpack.c.l.b16 %v833
    %v874 = vunpack.c.l.b16 %v834
    %v875 = vunpack.c.l.b16 %v835
    %v876 = vunpack.c.l.b16 %v836
    %v877 = vunpack.c.l.b16 %v837
    %v878 = vunpack.c.l.b16 %v838
    %v879 = vunpack.c.l.b16 %v839
    %v880 = vunpack.c.l.b16 %v840
    %v881 = vunpack.c.l.b16 %v841
    %v882 = vunpack.c.l.b16 %v842
    %v883 = vunpack.c.l.b16 %v843
    %v884 = vunpack.c.l.b16 %v844
    %v885 = vunpack.c.l.b16 %v845
    %v886 = vpack.c.b16 %v871, %v870
    %v887 = vpack.c.b16 %v873, %v872
    %v888 = vpack.c.b16 %v875, %v874
    %v889 = vpack.c.b16 %v877, %v876
    %v890 = vpack.c.b16 %v879, %v878
    %v891 = vpack.c.b16 %v881, %v880
    %v892 = vpack.c.b16 %v883, %v882
    %v893 = vpack.c.b16 %v885, %v884
    %902 = vmatprep.subr.bf16.mxu0 0
    %903 = vmatpush1.bf16.msra.mxu0 %v886
    %904 = vmatprep.subr.bf16.mxu0 0
    %905 = vmatpush1.bf16.msra.mxu0 %v887
    %906 = vmatprep.subr.bf16.mxu0 0
    %907 = vmatpush1.bf16.msra.mxu0 %v888
    %908 = vmatprep.subr.bf16.mxu0 0
    %909 = vmatpush1.bf16.msra.mxu0 %v889
    %910 = vmatprep.subr.bf16.mxu0 0
    %911 = vmatpush1.bf16.msra.mxu0 %v890
    %912 = vmatprep.subr.bf16.mxu0 0
    %913 = vmatpush1.bf16.msra.mxu0 %v891
    %914 = vmatprep.subr.bf16.mxu0 0
    %915 = vmatpush1.bf16.msra.mxu0 %v892
    %916 = vmatprep.subr.bf16.mxu0 0
    %917 = vmatpush1.bf16.msra.mxu0 %v893
    %918 = vmatprep.subr.bf16.mxu0 0
    %919 = vmatpush1.bf16.msra.mxu0 0
    %920 = vmatprep.subr.bf16.mxu0 0
    %921 = vmatpush1.bf16.msra.mxu0 0
    %922 = vmatprep.subr.bf16.mxu0 0
    %923 = vmatpush1.bf16.msra.mxu0 0
    %924 = vmatprep.subr.bf16.mxu0 0
    %925 = vmatpush1.bf16.msra.mxu0 0
    %926 = vmatprep.subr.bf16.mxu0 0
    %927 = vmatpush1.bf16.msra.mxu0 0
    %928 = vmatprep.subr.bf16.mxu0 0
    %929 = vmatpush1.bf16.msra.mxu0 0
    %930 = vmatprep.subr.bf16.mxu0 0
    %931 = vmatpush1.bf16.msra.mxu0 0
    %932 = vmatprep.subr.bf16.mxu0 0
    %933 = vmatpush1.bf16.msra.mxu0 0
    %934 = vmatprep.mubr.bf16.mxu0 0
    %935 = vmatmul.mubr.bf16.gmra.mrb[0].mxu0 %v828
    %v936 = vpop.f32.mrb[0].mxu0
    %v937 = vadd.f32 %v852, %v936
    %v938 = vpop.f32.mrb[0].mxu0
    %v939 = vpop.f32.mrb[0].mxu0
    %v940 = vadd.f32 %v852, %v939
    %v941 = vpop.f32.mrb[0].mxu0
    %942 = vdwg.mxu0
    %v943 = vmul.f32 %v937, 0.70710677
    %v944 = vmul.f32 %v940, 0.70710677
    %vm945 = vcmp.ge.f32.partialorder %v943, 0.0
    %vm946 = vcmp.ge.f32.partialorder %v944, 0.0
    %v947 = vsel %vm945, 1.0, -1.0
    %v948 = vsel %vm946, 1.0, -1.0
    %v949 = vand.u32 2147483647, %v943
    %v950 = vand.u32 2147483647, %v944
    %v951 = vmul.f32 %v949, 0.3275911
    %v952 = vmul.f32 %v950, 0.3275911
    %v953 = vadd.f32 %v951, 1.0
    %v954 = vadd.f32 %v952, 1.0
    %v955 = vrcp.pop %v953
    %v956 = vrcp.pop %v954
    %v957 = vmul.f32 %v955, 1.0614054
    %v958 = vmul.f32 %v956, 1.0614054
    %v959 = vadd.f32 %v957, -1.4531521
    %v960 = vadd.f32 %v958, -1.4531521
    %v961 = vmul.f32 %v959, %v955
    %v962 = vmul.f32 %v960, %v956
    %v963 = vadd.f32 %v961, 1.4214138
    %v964 = vadd.f32 %v962, 1.4214138
    %v965 = vmul.f32 %v963, %v955
    %v966 = vmul.f32 %v964, %v956
    %v967 = vadd.f32 %v965, -0.28449672
    %v968 = vadd.f32 %v966, -0.28449672
    %v969 = vmul.f32 %v967, %v955
    %v970 = vmul.f32 %v968, %v956
    %v971 = vadd.f32 %v969, 0.2548296
    %v972 = vadd.f32 %v970, 0.2548296
    %v973 = vmul.f32 %v971, %v955
    %v974 = vmul.f32 %v972, %v956
    %v975 = vsub.f32 0.0, %v949
    %v976 = vsub.f32 0.0, %v950
    %v977 = vmul.f32 %v975, %v949
    %v978 = vmul.f32 %v976, %v950
    %v979 = vmul.f32 %v977, 1.442695
    %v980 = vpow.pop %v979
    %v981 = vmul.f32 %v978, 1.442695
    %v982 = vpow.pop %v981
    %v983 = vmul.f32 %v973, %v980
    %v984 = vmul.f32 %v974, %v982
    %v985 = vsub.f32 1.0, %v983
    %v986 = vsub.f32 1.0, %v984
    %v987 = vmul.f32 %v947, %v985
    %v988 = vmul.f32 %v948, %v986
    %v989 = vmul.f32 %v937, 0.5
    %v990 = vmul.f32 %v940, 0.5
    %v991 = vadd.f32 %v987, 1.0
    %v992 = vadd.f32 %v988, 1.0
    %v993 = vmul.f32 %v989, %v991
    %v994 = vmul.f32 %v990, %v992
    %v995 = vpack.c.bf16 %v994, %v993
    %s996 = scalar_lea.vmem [#allocation4], 64
    %v997 = vld [vmem:[%s996] sm:$0xf]
    %v998 = vld [vmem:[%s996 + $0x4] sm:$0xf]
    %v999 = vld [vmem:[%s996 + $0x8] sm:$0xf]
    %v1000 = vld [vmem:[%s996 + $0xc] sm:$0xf]
    %v1001 = vld [vmem:[%s996 + $0x10] sm:$0xf]
    %v1002 = vld [vmem:[%s996 + $0x14] sm:$0xf]
    %v1003 = vld [vmem:[%s996 + $0x18] sm:$0xf]
    %v1004 = vld [vmem:[%s996 + $0x1c] sm:$0xf]
    %v1005 = vld [vmem:[%s996 + $0x20] sm:$0xf]
    %v1006 = vld [vmem:[%s996 + $0x24] sm:$0xf]
    %v1007 = vld [vmem:[%s996 + $0x28] sm:$0xf]
    %v1008 = vld [vmem:[%s996 + $0x2c] sm:$0xf]
    %v1009 = vld [vmem:[%s996 + $0x30] sm:$0xf]
    %v1010 = vld [vmem:[%s996 + $0x34] sm:$0xf]
    %v1011 = vld [vmem:[%s996 + $0x38] sm:$0xf]
    %v1012 = vld [vmem:[%s996 + $0x3c] sm:$0xf]
    %s1013 = scalar_lea.vmem %s10, 1
    %v1014 = vld [vmem:[%s1013] sm:$0x1]
    %v1016 = vlaneseq
    %v1017 = vshrl.u32 %v1016, 7
    %v1018 = vsub.s32 0, %v1017
    %v1019 = vrot.slane %v1014, %v1018
    %v1037 = vunpack.c.l.b16 %v997
    %v1038 = vunpack.c.l.b16 %v998
    %v1039 = vunpack.c.l.b16 %v999
    %v1040 = vunpack.c.l.b16 %v1000
    %v1041 = vunpack.c.l.b16 %v1001
    %v1042 = vunpack.c.l.b16 %v1002
    %v1043 = vunpack.c.l.b16 %v1003
    %v1044 = vunpack.c.l.b16 %v1004
    %v1045 = vunpack.c.l.b16 %v1005
    %v1046 = vunpack.c.l.b16 %v1006
    %v1047 = vunpack.c.l.b16 %v1007
    %v1048 = vunpack.c.l.b16 %v1008
    %v1049 = vunpack.c.l.b16 %v1009
    %v1050 = vunpack.c.l.b16 %v1010
    %v1051 = vunpack.c.l.b16 %v1011
    %v1052 = vunpack.c.l.b16 %v1012
    %v1053 = vpack.c.b16 %v1038, %v1037
    %v1054 = vpack.c.b16 %v1040, %v1039
    %v1055 = vpack.c.b16 %v1042, %v1041
    %v1056 = vpack.c.b16 %v1044, %v1043
    %v1057 = vpack.c.b16 %v1046, %v1045
    %v1058 = vpack.c.b16 %v1048, %v1047
    %v1059 = vpack.c.b16 %v1050, %v1049
    %v1060 = vpack.c.b16 %v1052, %v1051
    %1069 = vmatprep.subr.bf16.mxu0 0
    %1070 = vmatpush1.bf16.msra.mxu0 %v1053
    %1071 = vmatprep.subr.bf16.mxu0 0
    %1072 = vmatpush1.bf16.msra.mxu0 %v1054
    %1073 = vmatprep.subr.bf16.mxu0 0
    %1074 = vmatpush1.bf16.msra.mxu0 %v1055
    %1075 = vmatprep.subr.bf16.mxu0 0
    %1076 = vmatpush1.bf16.msra.mxu0 %v1056
    %1077 = vmatprep.subr.bf16.mxu0 0
    %1078 = vmatpush1.bf16.msra.mxu0 %v1057
    %1079 = vmatprep.subr.bf16.mxu0 0
    %1080 = vmatpush1.bf16.msra.mxu0 %v1058
    %1081 = vmatprep.subr.bf16.mxu0 0
    %1082 = vmatpush1.bf16.msra.mxu0 %v1059
    %1083 = vmatprep.subr.bf16.mxu0 0
    %1084 = vmatpush1.bf16.msra.mxu0 %v1060
    %1085 = vmatprep.subr.bf16.mxu0 0
    %1086 = vmatpush1.bf16.msra.mxu0 0
    %1087 = vmatprep.subr.bf16.mxu0 0
    %1088 = vmatpush1.bf16.msra.mxu0 0
    %1089 = vmatprep.subr.bf16.mxu0 0
    %1090 = vmatpush1.bf16.msra.mxu0 0
    %1091 = vmatprep.subr.bf16.mxu0 0
    %1092 = vmatpush1.bf16.msra.mxu0 0
    %1093 = vmatprep.subr.bf16.mxu0 0
    %1094 = vmatpush1.bf16.msra.mxu0 0
    %1095 = vmatprep.subr.bf16.mxu0 0
    %1096 = vmatpush1.bf16.msra.mxu0 0
    %1097 = vmatprep.subr.bf16.mxu0 0
    %1098 = vmatpush1.bf16.msra.mxu0 0
    %1099 = vmatprep.subr.bf16.mxu0 0
    %1100 = vmatpush1.bf16.msra.mxu0 0
    %1101 = vmatprep.mubr.bf16.mxu0 0
    %1102 = vmatmul.mubr.bf16.gmra.mrb[0].mxu0 %v995
    %v1103 = vpop.f32.mrb[0].mxu0
    %v1104 = vadd.f32 %v1019, %v1103
    %v1105 = vpop.f32.mrb[0].mxu0
    %v1106 = vpop.f32.mrb[0].mxu0
    %v1107 = vadd.f32 %v1019, %v1106
    %v1108 = vpop.f32.mrb[0].mxu0
    %1109 = vdwg.mxu0
    %s1110 = scalar_lea.vmem %s11, 1
    %v1111 = vld [vmem:[%s1110] sm:$0x1]
    %s1112 = scalar_lea.vmem %s12, 1
    %v1113 = vld [vmem:[%s1112] sm:$0x1]
    %1114 = vadd.xlane.f32.xlu0 %v1104
    %v1115 = vpop.xlane.xlu0 %1114
    %1116 = vadd.xlane.f32.xlu0 %v1107
    %v1117 = vpop.xlane.xlu0 %1116
    %v1118 = vmul.f32 %v1115, 0.015625
    %v1119 = vmul.f32 %v1117, 0.015625
    %v1120 = vsub.f32 %v1104, %v1118
    %v1121 = vsub.f32 %v1107, %v1119
    %v1122 = vmul.f32 %v1120, %v102
    %v1123 = vmul.f32 %v1121, %v102
    %v1124 = vmul.f32 %v1122, %v1122
    %v1125 = vmul.f32 %v1123, %v1123
    %1126 = vadd.xlane.f32.xlu0 %v1124
    %v1127 = vpop.xlane.xlu0 %1126
    %1128 = vadd.xlane.f32.xlu0 %v1125
    %v1129 = vpop.xlane.xlu0 %1128
    %v1130 = vmul.f32 %v1127, 0.015625
    %v1131 = vmul.f32 %v1129, 0.015625
    %v1132 = vadd.f32 %v1130, 1e-05
    %v1133 = vadd.f32 %v1131, 1e-05
    %v1134 = vrsqrt.pop %v1132
    %v1135 = vrsqrt.pop %v1133
    %v1136 = vmul.f32 %v1122, %v1134
    %v1137 = vmul.f32 %v1123, %v1135
    %v1139 = vlaneseq
    %v1140 = vshrl.u32 %v1139, 7
    %v1141 = vsub.s32 0, %v1140
    %v1142 = vrot.slane %v1111, %v1141
    %v1144 = vmul.f32 %v1136, %v1142
    %v1145 = vmul.f32 %v1137, %v1142
    %v1147 = vlaneseq
    %v1148 = vshrl.u32 %v1147, 7
    %v1149 = vsub.s32 0, %v1148
    %v1150 = vrot.slane %v1113, %v1149
    %v1152 = vadd.f32 %v1144, %v1150
    %v1153 = vadd.f32 %v1145, %v1150
    %v1154 = vpack.c.bf16 %v1153, %v1152
    %v1155 = vpack.c.bf16 %v783, %v782
    %s1156 = scalar_lea.vmem [#allocation6], 128
    %v1157 = vld [vmem:[%s1156] sm:$0xf]
    %v1158 = vld [vmem:[%s1156 + $0x4] sm:$0xf]
    %v1159 = vld [vmem:[%s1156 + $0x8] sm:$0xf]
    %v1160 = vld [vmem:[%s1156 + $0xc] sm:$0xf]
    %v1161 = vld [vmem:[%s1156 + $0x10] sm:$0xf]
    %v1162 = vld [vmem:[%s1156 + $0x14] sm:$0xf]
    %v1163 = vld [vmem:[%s1156 + $0x18] sm:$0xf]
    %v1164 = vld [vmem:[%s1156 + $0x1c] sm:$0xf]
    %v1165 = vld [vmem:[%s1156 + $0x20] sm:$0xf]
    %v1166 = vld [vmem:[%s1156 + $0x24] sm:$0xf]
    %v1167 = vld [vmem:[%s1156 + $0x28] sm:$0xf]
    %v1168 = vld [vmem:[%s1156 + $0x2c] sm:$0xf]
    %v1169 = vld [vmem:[%s1156 + $0x30] sm:$0xf]
    %v1170 = vld [vmem:[%s1156 + $0x34] sm:$0xf]
    %v1171 = vld [vmem:[%s1156 + $0x38] sm:$0xf]
    %v1172 = vld [vmem:[%s1156 + $0x3c] sm:$0xf]
    %v1173 = vld [vmem:[%s1156 + $0x40] sm:$0xf]
    %v1174 = vld [vmem:[%s1156 + $0x44] sm:$0xf]
    %v1175 = vld [vmem:[%s1156 + $0x48] sm:$0xf]
    %v1176 = vld [vmem:[%s1156 + $0x4c] sm:$0xf]
    %v1177 = vld [vmem:[%s1156 + $0x50] sm:$0xf]
    %v1178 = vld [vmem:[%s1156 + $0x54] sm:$0xf]
    %v1179 = vld [vmem:[%s1156 + $0x58] sm:$0xf]
    %v1180 = vld [vmem:[%s1156 + $0x5c] sm:$0xf]
    %v1181 = vld [vmem:[%s1156 + $0x60] sm:$0xf]
    %v1182 = vld [vmem:[%s1156 + $0x64] sm:$0xf]
    %v1183 = vld [vmem:[%s1156 + $0x68] sm:$0xf]
    %v1184 = vld [vmem:[%s1156 + $0x6c] sm:$0xf]
    %v1185 = vld [vmem:[%s1156 + $0x70] sm:$0xf]
    %v1186 = vld [vmem:[%s1156 + $0x74] sm:$0xf]
    %v1187 = vld [vmem:[%s1156 + $0x78] sm:$0xf]
    %v1188 = vld [vmem:[%s1156 + $0x7c] sm:$0xf]
    %s1189 = scalar_lea.vmem %s14, 1
    %v1190 = vld [vmem:[%s1189] sm:$0x1]
    %v1192 = vlaneseq
    %v1193 = vshrl.u32 %v1192, 7
    %v1194 = vsub.s32 0, %v1193
    %v1195 = vrot.slane %v1190, %v1194
    %v1229 = vunpack.c.l.b16 %v1157
    %v1230 = vunpack.c.l.b16 %v1158
    %v1231 = vunpack.c.l.b16 %v1159
    %v1232 = vunpack.c.l.b16 %v1160
    %v1233 = vunpack.c.l.b16 %v1161
    %v1234 = vunpack.c.l.b16 %v1162
    %v1235 = vunpack.c.l.b16 %v1163
    %v1236 = vunpack.c.l.b16 %v1164
    %v1237 = vunpack.c.l.b16 %v1165
    %v1238 = vunpack.c.l.b16 %v1166
    %v1239 = vunpack.c.l.b16 %v1167
    %v1240 = vunpack.c.l.b16 %v1168
    %v1241 = vunpack.c.l.b16 %v1169
    %v1242 = vunpack.c.l.b16 %v1170
    %v1243 = vunpack.c.l.b16 %v1171
    %v1244 = vunpack.c.l.b16 %v1172
    %v1245 = vunpack.c.l.b16 %v1173
    %v1246 = vunpack.c.l.b16 %v1174
    %v1247 = vunpack.c.l.b16 %v1175
    %v1248 = vunpack.c.l.b16 %v1176
    %v1249 = vunpack.c.l.b16 %v1177
    %v1250 = vunpack.c.l.b16 %v1178
    %v1251 = vunpack.c.l.b16 %v1179
    %v1252 = vunpack.c.l.b16 %v1180
    %v1253 = vunpack.c.l.b16 %v1181
    %v1254 = vunpack.c.l.b16 %v1182
    %v1255 = vunpack.c.l.b16 %v1183
    %v1256 = vunpack.c.l.b16 %v1184
    %v1257 = vunpack.c.l.b16 %v1185
    %v1258 = vunpack.c.l.b16 %v1186
    %v1259 = vunpack.c.l.b16 %v1187
    %v1260 = vunpack.c.l.b16 %v1188
    %v1261 = vpack.c.b16 %v1230, %v1229
    %v1262 = vpack.c.b16 %v1232, %v1231
    %v1263 = vpack.c.b16 %v1234, %v1233
    %v1264 = vpack.c.b16 %v1236, %v1235
    %v1265 = vpack.c.b16 %v1238, %v1237
    %v1266 = vpack.c.b16 %v1240, %v1239
    %v1267 = vpack.c.b16 %v1242, %v1241
    %v1268 = vpack.c.b16 %v1244, %v1243
    %v1269 = vpack.c.b16 %v1246, %v1245
    %v1270 = vpack.c.b16 %v1248, %v1247
    %v1271 = vpack.c.b16 %v1250, %v1249
    %v1272 = vpack.c.b16 %v1252, %v1251
    %v1273 = vpack.c.b16 %v1254, %v1253
    %v1274 = vpack.c.b16 %v1256, %v1255
    %v1275 = vpack.c.b16 %v1258, %v1257
    %v1276 = vpack.c.b16 %v1260, %v1259
    %1293 = vmatprep.subr.bf16.mxu0 0
    %1294 = vmatpush1.bf16.msra.mxu0 %v1261
    %1295 = vmatprep.subr.bf16.mxu0 0
    %1296 = vmatpush1.bf16.msra.mxu0 %v1262
    %1297 = vmatprep.subr.bf16.mxu0 0
    %1298 = vmatpush1.bf16.msra.mxu0 %v1263
    %1299 = vmatprep.subr.bf16.mxu0 0
    %1300 = vmatpush1.bf16.msra.mxu0 %v1264
    %1301 = vmatprep.subr.bf16.mxu0 0
    %1302 = vmatpush1.bf16.msra.mxu0 %v1265
    %1303 = vmatprep.subr.bf16.mxu0 0
    %1304 = vmatpush1.bf16.msra.mxu0 %v1266
    %1305 = vmatprep.subr.bf16.mxu0 0
    %1306 = vmatpush1.bf16.msra.mxu0 %v1267
    %1307 = vmatprep.subr.bf16.mxu0 0
    %1308 = vmatpush1.bf16.msra.mxu0 %v1268
    %1309 = vmatprep.subr.bf16.mxu0 0
    %1310 = vmatpush1.bf16.msra.mxu0 %v1269
    %1311 = vmatprep.subr.bf16.mxu0 0
    %1312 = vmatpush1.bf16.msra.mxu0 %v1270
    %1313 = vmatprep.subr.bf16.mxu0 0
    %1314 = vmatpush1.bf16.msra.mxu0 %v1271
    %1315 = vmatprep.subr.bf16.mxu0 0
    %1316 = vmatpush1.bf16.msra.mxu0 %v1272
    %1317 = vmatprep.subr.bf16.mxu0 0
    %1318 = vmatpush1.bf16.msra.mxu0 %v1273
    %1319 = vmatprep.subr.bf16.mxu0 0
    %1320 = vmatpush1.bf16.msra.mxu0 %v1274
    %1321 = vmatprep.subr.bf16.mxu0 0
    %1322 = vmatpush1.bf16.msra.mxu0 %v1275
    %1323 = vmatprep.subr.bf16.mxu0 0
    %1324 = vmatpush1.bf16.msra.mxu0 %v1276
    %1325 = vmatprep.mubr.bf16.mxu0 %v1155
    %1326 = vmatmul.mubr.bf16.gmra.mrb[0].mxu0 %v1154
    %v1327 = vpop.f32.mrb[0].mxu0
    %v1328 = vadd.f32 %v1195, %v1327
    %v1329 = vpop.f32.mrb[0].mxu0
    %v1330 = vpop.f32.mrb[0].mxu0
    %v1331 = vadd.f32 %v1195, %v1330
    %v1332 = vpop.f32.mrb[0].mxu0
    %1333 = vdwg.mxu0
    %v1334 = vxor.u32 %v1328, 2147483648
    %v1335 = vxor.u32 %v1331, 2147483648
    %v1336 = vmul.f32 %v1334, 1.442695
    %v1337 = vpow.pop %v1336
    %v1338 = vmul.f32 %v1335, 1.442695
    %v1339 = vpow.pop %v1338
    %v1340 = vadd.f32 %v1337, 1.0
    %v1341 = vadd.f32 %v1339, 1.0
    %v1342 = vrcp.pop %v1340
    %v1343 = vmul.f32 1.0, %v1342
    %v1344 = vrcp.pop %v1341
    %v1345 = vmul.f32 1.0, %v1344
    %v1346 = vsub.f32 %v1152, %v782
    %v1347 = vsub.f32 %v1153, %v783
    %v1348 = vmul.f32 %v1343, %v1346
    %v1349 = vmul.f32 %v1345, %v1347
    %v1350 = vadd.f32 %v782, %v1348
    %v1351 = vadd.f32 %v783, %v1349
    %v1352 = vld [vmem:[%s15] sm:$0x1]
    %v1353 = vld [vmem:[%s16] sm:$0x1]
    %1354 = vadd.xlane.f32.xlu0 %v1350
    %v1355 = vpop.xlane.xlu0 %1354
    %1356 = vadd.xlane.f32.xlu0 %v1351
    %v1357 = vpop.xlane.xlu0 %1356
    %v1358 = vmul.f32 %v1355, 0.015625
    %v1359 = vmul.f32 %v1357, 0.015625
    %v1360 = vsub.f32 %v1350, %v1358
    %v1361 = vsub.f32 %v1351, %v1359
    %v1362 = vmul.f32 %v1360, %v102
    %v1363 = vmul.f32 %v1361, %v102
    %v1364 = vmul.f32 %v1362, %v1362
    %v1365 = vmul.f32 %v1363, %v1363
    %1366 = vadd.xlane.f32.xlu0 %v1364
    %v1367 = vpop.xlane.xlu0 %1366
    %1368 = vadd.xlane.f32.xlu0 %v1365
    %v1369 = vpop.xlane.xlu0 %1368
    %v1370 = vmul.f32 %v1367, 0.015625
    %v1371 = vmul.f32 %v1369, 0.015625
    %v1372 = vadd.f32 %v1370, 1e-05
    %v1373 = vadd.f32 %v1371, 1e-05
    %v1374 = vrsqrt.pop %v1372
    %v1375 = vrsqrt.pop %v1373
    %v1376 = vmul.f32 %v1362, %v1374
    %v1377 = vmul.f32 %v1363, %v1375
    %v1379 = vlaneseq
    %v1380 = vshrl.u32 %v1379, 7
    %v1381 = vsub.s32 0, %v1380
    %v1382 = vrot.slane %v1352, %v1381
    %v1384 = vmul.f32 %v1376, %v1382
    %v1385 = vmul.f32 %v1377, %v1382
    %v1387 = vlaneseq
    %v1388 = vshrl.u32 %v1387, 7
    %v1389 = vsub.s32 0, %v1388
    %v1390 = vrot.slane %v1353, %v1389
    %v1392 = vadd.f32 %v1384, %v1390
    %v1393 = vadd.f32 %v1385, %v1390
    %1394 = vst [vmem:[%s17] sm:$0xff] %v1392
    %1395 = vst [vmem:[%s17 + $0x8] sm:$0xff] %v1393
    // Predicated region
    $region82: #{input_module_forward.1} parent=1 // pred_check
      _
    $region83: #{input_module_forward.1} parent=1 // pred_check_branch
      %1397 = sbr.rel (0) target = $region85
    $region84: #{input_module_forward.1} parent=1 // pred_region
      _
    $region85: #{input_module_forward.1} parent=1 // pred_fallthru
      _
    // Predicated region
    $region86: #{input_module_forward.1} parent=1 // pred_check
      _
    $region87: #{input_module_forward.1} parent=1 // pred_check_branch
      %1399 = sbr.rel (0) target = $region89
    $region88: #{input_module_forward.1} parent=1 // pred_region
      _
    $region89: #{input_module_forward.1} parent=1 // pred_fallthru
      _
    %1400 = vsyncpa [#allocation3], 1
    %1401 = vsyncpa [#allocation5], 1

</llo_original>
